<compile_context>
chip_gen: v7x
topology: tpu7x:2x2x1
jax: 0.10.0
libtpu: 0.0.40
codegen_flags: <defaults>
</compile_context>

<pallas_src>
import jax
import jax.numpy as jnp
import numpy as np
from jax import lax
from jax.experimental import pallas as pl
from jax.experimental.pallas import tpu as pltpu


def _scoring_kernel(lens_ref,   # VMEM (1, BB)  int32   per-bag valid lengths
                    bag_ref,    # VMEM (N, D, BB)       node embeddings (bf16/f32)
                    wt_ref,     # VMEM (2, D, D) f32    [w1^T, w3^T]
                    vec_ref,    # VMEM (4, D, 1) f32    [b1, w2, b3, w4] columns
                    sc_ref,     # SMEM (2,)      f32    [b2 (unused*), b4]
                    out_ref):   # VMEM (1, 1, BB) f32   per-bag predictions
    # *b2 shifts every per-node score equally; softmax is shift-invariant, so
    #  omitting it is exactly equivalent to the PyTorch module.
    N, D, BB = bag_ref.shape

    lens = lens_ref[...]                       # (1, BB) int32, bags on lanes
    w1t = wt_ref[0]                            # (D, D) = w1^T
    w3t = wt_ref[1]                            # (D, D) = w3^T
    b1c = vec_ref[0]                           # (D, 1)
    w2c = vec_ref[1]                           # (D, 1)
    b3c = vec_ref[2]                           # (D, 1)
    w4c = vec_ref[3]                           # (D, 1)
    b4 = sc_ref[1]

    # ---- theta: per-node score, lane-dense over bags ------------------------
    # h_n^T = relu(w1^T @ bag_n + b1) is (D, BB);  s_n = w2 . h_n  is (1, BB).
    # N is small and static, so a python-unrolled loop of (D,D)x(D,BB) MXU
    # matmuls keeps everything lane-dense (bags on lanes) even for D < 128.
    s_rows = []
    for n in range(N):
        xb = bag_ref[n].astype(jnp.float32)                       # (D, BB)
        hn = jnp.maximum(
            jnp.dot(w1t, xb, preferred_element_type=jnp.float32) + b1c, 0.0)
        s_rows.append(jnp.sum(w2c * hn, axis=0, keepdims=True))   # (1, BB)
    s = jnp.concatenate(s_rows, axis=0)                           # (N, BB)

    # ---- masked softmax over the node axis (VPU + tiny sublane reduce) ------
    node = lax.broadcasted_iota(jnp.int32, (N, BB), 0)
    valid = node < lens                                           # (N, BB)
    s = jnp.where(valid, s, -1e30)             # finite sentinel: no NaN path
    m = jnp.max(s, axis=0, keepdims=True)                         # (1, BB)
    p = jnp.where(valid, jnp.exp(s - m), 0.0)                     # (N, BB)
    denom = jnp.sum(p, axis=0, keepdims=True)                     # (1, BB)
    inv = pl.reciprocal(jnp.where(denom > 0.0, denom, 1.0), approx=True)

    # ---- attention-weighted mean (normalization deferred to one multiply) ---
    wsum = p[0:1, :] * bag_ref[0].astype(jnp.float32)             # (D, BB)
    for n in range(1, N):
        wsum = wsum + p[n:n + 1, :] * bag_ref[n].astype(jnp.float32)
    avg = wsum * inv                                              # (D, BB)

    # ---- out MLP, transposed so bags stay on the lane axis ------------------
    h2 = jnp.maximum(
        jnp.dot(w3t, avg, preferred_element_type=jnp.float32) + b3c, 0.0)
    pred = jnp.sum(w4c * h2, axis=0, keepdims=True) + b4          # (1, BB)

    # Empty / padded bags -> 0.0, matching the PyTorch module.
    pred = jnp.where(lens > 0, pred, 0.0)
    # Lane-dense store; adding leading singleton axes is layout-free.
    out_ref[...] = pred.reshape(1, 1, BB)


def _round_up(x, m):
    return ((x + m - 1) // m) * m


def _choose_bag_tile(num_bags, n_nodes, d, itemsize,
                     vmem_budget_bytes=8 * 1024 * 1024, bb_max=1024):
    """Bag-axis tile: multiple of 128, sized against a conservative VMEM budget
    (double-buffered bag block), capped so tiny inputs aren't over-padded, and
    preferring >= 2 grid steps when possible so v7x's second TensorCore gets
    work (the grid axis is "parallel"; neutral on single-TC v5e/v6e)."""
    nb = _round_up(max(num_bags, 1), 128)
    cap = max(128, (vmem_budget_bytes // (2 * n_nodes * d * itemsize) // 128) * 128)
    bb = min(bb_max, cap, nb)
    if pl.cdiv(nb, bb) < 2 and nb >= 256:
        bb = max(128, ((nb // 2) // 128) * 128)
    return bb


def scoring_function_reg(bags_ndb, lengths, params, *, bb=None,
                         bag_dtype=jnp.bfloat16):
    """Batched ScoringFunctionReg forward.

    bags_ndb : (N, D, num_bags) padded node embeddings, bag axis minor.  This
               producer-side layout keeps the kernel lane-dense over bags and
               lets the wrapper avoid any transpose; ideally it is already
               stored as `bag_dtype` (bf16) and with num_bags a multiple of
               the bag tile, in which case the wrapper makes no copies at all.
    lengths  : (num_bags,) int  number of valid nodes per bag (0 => empty bag).
    returns  : (num_bags,) f32  per-bag predictions (0.0 for empty bags).
    """
    N, D, num_bags = bags_ndb.shape
    w1, b1, w2, b2, w3, b3, w4, b4 = params

    if bb is None:
        bb = _choose_bag_tile(num_bags, N, D, np.dtype(bag_dtype).itemsize)
    G = pl.cdiv(num_bags, bb)
    nb_pad = G * bb

    lens = jnp.clip(lengths.astype(jnp.int32), 0, N).reshape(1, num_bags)
    bags = bags_ndb
    if nb_pad != num_bags:        # copies only when bag count isn't tile-aligned
        lens = jnp.pad(lens, ((0, 0), (0, nb_pad - num_bags)))
        bags = jnp.pad(bags, ((0, 0), (0, 0), (0, nb_pad - num_bags)))
    if bags.dtype != bag_dtype:   # copies only when not already stored as bag_dtype
        bags = bags.astype(bag_dtype)

    # Tiny VMEM-resident parameters: transposed (D, D) weights, column vectors,
    # and the two scalar biases in SMEM.
    wt = jnp.stack([w1.T, w3.T]).astype(jnp.float32)                    # (2, D, D)
    vec = jnp.stack([b1.reshape(D, 1), w2.reshape(D, 1),
                     b3.reshape(D, 1), w4.reshape(D, 1)]).astype(jnp.float32)
    scal = jnp.stack([jnp.asarray(b2).reshape(()),
                      jnp.asarray(b4).reshape(())]).astype(jnp.float32)  # (2,)

    out = pl.pallas_call(
        _scoring_kernel,
        out_shape=jax.ShapeDtypeStruct((G, 1, bb), jnp.float32),
        grid=(G,),
        in_specs=[
            pl.BlockSpec((1, bb), lambda g: (0, g)),            # lengths (lane-dense)
            pl.BlockSpec((N, D, bb), lambda g: (0, 0, g)),      # bag embeddings
            pl.BlockSpec((2, D, D), lambda g: (0, 0, 0)),       # stacked W^T
            pl.BlockSpec((4, D, 1), lambda g: (0, 0, 0)),       # stacked vectors
            pl.BlockSpec(memory_space=pltpu.MemorySpace.SMEM),  # scalar biases
        ],
        out_specs=pl.BlockSpec((1, 1, bb), lambda g: (g, 0, 0)),
        compiler_params=pltpu.CompilerParams(
            dimension_semantics=("parallel",),
            vmem_limit_bytes=32 * 1024 * 1024),
    )(lens, bags, wt, vec, scal)

    return out.reshape(G * bb)[:num_bags]


def init_params(key, D):
    # Deterministic synthetic init (uniform +-1/sqrt(fan_in), like nn.Linear).
    ks = jax.random.split(key, 8)
    bound = 1.0 / np.sqrt(D)
    u = lambda k, shape: jax.random.uniform(k, shape, jnp.float32, -bound, bound)
    w1, b1 = u(ks[0], (D, D)), u(ks[1], (1, D))
    w2, b2 = u(ks[2], (D, 1)), u(ks[3], (1, 1))
    w3, b3 = u(ks[4], (D, D)), u(ks[5], (1, D))
    w4, b4 = u(ks[6], (D, 1)), u(ks[7], (1, 1))
    return (w1, b1, w2, b2, w3, b3, w4, b4)


def reference_bags(bags_list, params):
    # Literal pure-JAX re-implementation of the PyTorch per-bag loop.
    w1, b1, w2, b2, w3, b3, w4, b4 = params
    preds = []
    for bag in bags_list:
        if bag.shape[0] == 0:
            preds.append(jnp.float32(0.0))
            continue
        h = jnp.maximum(bag @ w1 + b1, 0.0)
        s = (h @ w2 + b2)[:, 0]
        w = jax.nn.softmax(s, axis=0)
        avg = jnp.sum(w[:, None] * bag, axis=0)
        h2 = jnp.maximum(avg @ w3 + b3[0], 0.0)
        preds.append((h2 @ w4)[0] + b4[0, 0])
    return jnp.stack(preds)


def reference_padded(bags_ndb, lengths, params):
    # Vectorized pure-JAX reference on the padded (N, D, num_bags) layout.
    w1, b1, w2, b2, w3, b3, w4, b4 = params
    x = jnp.transpose(bags_ndb, (2, 0, 1)).astype(jnp.float32)   # (B, N, D)
    lengths = jnp.clip(lengths.astype(jnp.int32), 0, x.shape[1])
    h = jnp.maximum(jnp.einsum('bnd,de->bne', x, w1) + b1, 0.0)
    s = jnp.einsum('bne,e->bn', h, w2[:, 0]) + b2[0, 0]
    valid = jnp.arange(x.shape[1])[None, :] < lengths[:, None]
    s = jnp.where(valid, s, -jnp.inf)
    attn = jnp.where(valid, jax.nn.softmax(s, axis=1), 0.0)
    avg = jnp.einsum('bn,bnd->bd', attn, x)
    h2 = jnp.maximum(avg @ w3 + b3, 0.0)
    pred = h2 @ w4[:, 0] + b4[0, 0]
    return jnp.where(lengths > 0, pred, 0.0)


# TODO(synk): loss() (F.l1_loss) is not part of the forward pass and is not
# implemented as a kernel.

if __name__ == "__main__":
    D = 32          # embedding dim (in_dim)
    N = 8           # max nodes per bag (padding along the node axis)

    key = jax.random.PRNGKey(0)
    k_param, k_small, k_big, k_len = jax.random.split(key, 4)
    params = init_params(k_param, D)

    # --- case 1: 3 bags (one empty), mirrors the PyTorch list-of-bags call ---
    lengths1_py = [8, 5, 0]
    B1 = len(lengths1_py)
    # Upstream produces the (N, D, num_bags) layout directly, already in bf16,
    # so the wrapper does no transpose / cast (layout plumbing lives upstream).
    bags1 = jax.random.normal(k_small, (N, D, B1), jnp.float32).astype(jnp.bfloat16)
    lengths1 = jnp.array(lengths1_py, dtype=jnp.int32)

    preds1 = jax.block_until_ready(scoring_function_reg(bags1, lengths1, params))

    # Reference sees the same bf16-quantized embeddings (kernel math is f32).
    bags1_f32 = bags1.astype(jnp.float32)
    bags1_list = [bags1_f32[:lengths1_py[i], :, i] for i in range(B1)]
    ref1 = reference_bags(bags1_list, params)
    np.testing.assert_allclose(np.asarray(preds1), np.asarray(ref1),
                               rtol=1e-2, atol=1e-2)

    # --- case 2: a few hundred bags with mixed lengths -> multi-step grid ----
    B2 = 300
    bags2 = jax.random.normal(k_big, (N, D, B2), jnp.float32).astype(jnp.bfloat16)
    lengths2 = jax.random.randint(k_len, (B2,), 0, N + 1).astype(jnp.int32)
    lengths2 = lengths2.at[7].set(0)          # guarantee an empty bag is present

    preds2 = jax.block_until_ready(scoring_function_reg(bags2, lengths2, params))
    ref2 = reference_padded(bags2.astype(jnp.float32), lengths2, params)
    np.testing.assert_allclose(np.asarray(preds2), np.asarray(ref2),
                               rtol=1e-2, atol=1e-2)

    print("KERNEL_OK")
</pallas_src>

<mosaic_0001>
module attributes {stable_mosaic.version = 11 : i64} {
  func.func @_scoring_kernel(%arg0: i32, %arg1: memref<1x128xi32, #tpu.memory_space<vmem>>, %arg2: memref<8x32x128xbf16, #tpu.memory_space<vmem>>, %arg3: memref<2x32x32xf32, #tpu.memory_space<vmem>>, %arg4: memref<4x32x1xf32, #tpu.memory_space<vmem>>, %arg5: memref<2xf32, #tpu.memory_space<smem>>, %arg6: memref<1x1x128xf32, #tpu.memory_space<vmem>>) attributes {dimension_semantics = [#tpu.dimension_semantics<parallel>], iteration_bounds = array<i64: 1>, scalar_prefetch = 0 : i64, scratch_operands = 0 : i64, tpu.core_type = #tpu.core_type<tc>, window_params = [{transform_indices = @transform_0, window_bounds = array<i64: 1, 128>}, {transform_indices = @transform_1, window_bounds = array<i64: 8, 32, 128>}, {pipeline_mode = #tpu.pipeline_mode<synchronous>, transform_indices = @transform_2, window_bounds = array<i64: 2, 32, 32>}, {pipeline_mode = #tpu.pipeline_mode<synchronous>, transform_indices = @transform_3, window_bounds = array<i64: 4, 32, 1>}, {transform_indices = @transform_4, window_bounds = array<i64: 2>}, {transform_indices = @transform_5, window_bounds = array<i64: 1, 1, 128>}]} {
    %c0 = arith.constant 0 : index
    %c0_0 = arith.constant 0 : index
    %0 = vector.load %arg1[%c0, %c0_0] : memref<1x128xi32, #tpu.memory_space<vmem>>, vector<1x128xi32>
    %c0_1 = arith.constant 0 : index
    %c0_2 = arith.constant 0 : index
    %c0_3 = arith.constant 0 : index
    %1 = vector.load %arg3[%c0_1, %c0_2, %c0_3] : memref<2x32x32xf32, #tpu.memory_space<vmem>>, vector<1x32x32xf32>
    %2 = vector.shape_cast %1 : vector<1x32x32xf32> to vector<32x32xf32>
    %c1 = arith.constant 1 : index
    %c0_4 = arith.constant 0 : index
    %c0_5 = arith.constant 0 : index
    %3 = vector.load %arg3[%c1, %c0_4, %c0_5] : memref<2x32x32xf32, #tpu.memory_space<vmem>>, vector<1x32x32xf32>
    %4 = vector.shape_cast %3 : vector<1x32x32xf32> to vector<32x32xf32>
    %c0_6 = arith.constant 0 : index
    %c0_7 = arith.constant 0 : index
    %c0_8 = arith.constant 0 : index
    %5 = vector.load %arg4[%c0_6, %c0_7, %c0_8] : memref<4x32x1xf32, #tpu.memory_space<vmem>>, vector<1x32x1xf32>
    %6 = vector.shape_cast %5 : vector<1x32x1xf32> to vector<32x1xf32>
    %c1_9 = arith.constant 1 : index
    %c0_10 = arith.constant 0 : index
    %c0_11 = arith.constant 0 : index
    %7 = vector.load %arg4[%c1_9, %c0_10, %c0_11] : memref<4x32x1xf32, #tpu.memory_space<vmem>>, vector<1x32x1xf32>
    %8 = vector.shape_cast %7 : vector<1x32x1xf32> to vector<32x1xf32>
    %c2 = arith.constant 2 : index
    %c0_12 = arith.constant 0 : index
    %c0_13 = arith.constant 0 : index
    %9 = vector.load %arg4[%c2, %c0_12, %c0_13] : memref<4x32x1xf32, #tpu.memory_space<vmem>>, vector<1x32x1xf32>
    %10 = vector.shape_cast %9 : vector<1x32x1xf32> to vector<32x1xf32>
    %c3 = arith.constant 3 : index
    %c0_14 = arith.constant 0 : index
    %c0_15 = arith.constant 0 : index
    %11 = vector.load %arg4[%c3, %c0_14, %c0_15] : memref<4x32x1xf32, #tpu.memory_space<vmem>>, vector<1x32x1xf32>
    %12 = vector.shape_cast %11 : vector<1x32x1xf32> to vector<32x1xf32>
    %c1_16 = arith.constant 1 : index
    %13 = memref.load %arg5[%c1_16] : memref<2xf32, #tpu.memory_space<smem>>
    %c0_17 = arith.constant 0 : index
    %c0_18 = arith.constant 0 : index
    %c0_19 = arith.constant 0 : index
    %14 = vector.load %arg2[%c0_17, %c0_18, %c0_19] : memref<8x32x128xbf16, #tpu.memory_space<vmem>>, vector<1x32x128xbf16>
    %15 = vector.shape_cast %14 : vector<1x32x128xbf16> to vector<32x128xbf16>
    %16 = arith.extf %15 : vector<32x128xbf16> to vector<32x128xf32>
    %cst = arith.constant dense<0.000000e+00> : vector<32x128xf32>
    %17 = tpu.matmul %2, %16, %cst {dimension_numbers = #tpu.dot_dimension_numbers<[1], [0], [0], [1], [0, 0, 1, 1], [], []>} : vector<32x32xf32>, vector<32x128xf32>, vector<32x128xf32> -> vector<32x128xf32>
    %18 = vector.broadcast %6 : vector<32x1xf32> to vector<32x128xf32>
    %19 = arith.addf %17, %18 : vector<32x128xf32>
    %cst_20 = arith.constant 0.000000e+00 : f32
    %20 = vector.broadcast %cst_20 : f32 to vector<32x128xf32>
    %21 = arith.maximumf %19, %20 : vector<32x128xf32>
    %22 = vector.broadcast %8 : vector<32x1xf32> to vector<32x128xf32>
    %23 = arith.mulf %22, %21 : vector<32x128xf32>
    %cst_21 = arith.constant dense<0.000000e+00> : vector<128xf32>
    %24 = vector.multi_reduction <add>, %23, %cst_21 [0] : vector<32x128xf32> to vector<128xf32>
    %25 = vector.shape_cast %24 : vector<128xf32> to vector<1x128xf32>
    %c1_22 = arith.constant 1 : index
    %c0_23 = arith.constant 0 : index
    %c0_24 = arith.constant 0 : index
    %26 = vector.load %arg2[%c1_22, %c0_23, %c0_24] : memref<8x32x128xbf16, #tpu.memory_space<vmem>>, vector<1x32x128xbf16>
    %27 = vector.shape_cast %26 : vector<1x32x128xbf16> to vector<32x128xbf16>
    %28 = arith.extf %27 : vector<32x128xbf16> to vector<32x128xf32>
    %cst_25 = arith.constant dense<0.000000e+00> : vector<32x128xf32>
    %29 = tpu.matmul %2, %28, %cst_25 {dimension_numbers = #tpu.dot_dimension_numbers<[1], [0], [0], [1], [0, 0, 1, 1], [], []>} : vector<32x32xf32>, vector<32x128xf32>, vector<32x128xf32> -> vector<32x128xf32>
    %30 = vector.broadcast %6 : vector<32x1xf32> to vector<32x128xf32>
    %31 = arith.addf %29, %30 : vector<32x128xf32>
    %cst_26 = arith.constant 0.000000e+00 : f32
    %32 = vector.broadcast %cst_26 : f32 to vector<32x128xf32>
    %33 = arith.maximumf %31, %32 : vector<32x128xf32>
    %34 = vector.broadcast %8 : vector<32x1xf32> to vector<32x128xf32>
    %35 = arith.mulf %34, %33 : vector<32x128xf32>
    %cst_27 = arith.constant dense<0.000000e+00> : vector<128xf32>
    %36 = vector.multi_reduction <add>, %35, %cst_27 [0] : vector<32x128xf32> to vector<128xf32>
    %37 = vector.shape_cast %36 : vector<128xf32> to vector<1x128xf32>
    %c2_28 = arith.constant 2 : index
    %c0_29 = arith.constant 0 : index
    %c0_30 = arith.constant 0 : index
    %38 = vector.load %arg2[%c2_28, %c0_29, %c0_30] : memref<8x32x128xbf16, #tpu.memory_space<vmem>>, vector<1x32x128xbf16>
    %39 = vector.shape_cast %38 : vector<1x32x128xbf16> to vector<32x128xbf16>
    %40 = arith.extf %39 : vector<32x128xbf16> to vector<32x128xf32>
    %cst_31 = arith.constant dense<0.000000e+00> : vector<32x128xf32>
    %41 = tpu.matmul %2, %40, %cst_31 {dimension_numbers = #tpu.dot_dimension_numbers<[1], [0], [0], [1], [0, 0, 1, 1], [], []>} : vector<32x32xf32>, vector<32x128xf32>, vector<32x128xf32> -> vector<32x128xf32>
    %42 = vector.broadcast %6 : vector<32x1xf32> to vector<32x128xf32>
    %43 = arith.addf %41, %42 : vector<32x128xf32>
    %cst_32 = arith.constant 0.000000e+00 : f32
    %44 = vector.broadcast %cst_32 : f32 to vector<32x128xf32>
    %45 = arith.maximumf %43, %44 : vector<32x128xf32>
    %46 = vector.broadcast %8 : vector<32x1xf32> to vector<32x128xf32>
    %47 = arith.mulf %46, %45 : vector<32x128xf32>
    %cst_33 = arith.constant dense<0.000000e+00> : vector<128xf32>
    %48 = vector.multi_reduction <add>, %47, %cst_33 [0] : vector<32x128xf32> to vector<128xf32>
    %49 = vector.shape_cast %48 : vector<128xf32> to vector<1x128xf32>
    %c3_34 = arith.constant 3 : index
    %c0_35 = arith.constant 0 : index
    %c0_36 = arith.constant 0 : index
    %50 = vector.load %arg2[%c3_34, %c0_35, %c0_36] : memref<8x32x128xbf16, #tpu.memory_space<vmem>>, vector<1x32x128xbf16>
    %51 = vector.shape_cast %50 : vector<1x32x128xbf16> to vector<32x128xbf16>
    %52 = arith.extf %51 : vector<32x128xbf16> to vector<32x128xf32>
    %cst_37 = arith.constant dense<0.000000e+00> : vector<32x128xf32>
    %53 = tpu.matmul %2, %52, %cst_37 {dimension_numbers = #tpu.dot_dimension_numbers<[1], [0], [0], [1], [0, 0, 1, 1], [], []>} : vector<32x32xf32>, vector<32x128xf32>, vector<32x128xf32> -> vector<32x128xf32>
    %54 = vector.broadcast %6 : vector<32x1xf32> to vector<32x128xf32>
    %55 = arith.addf %53, %54 : vector<32x128xf32>
    %cst_38 = arith.constant 0.000000e+00 : f32
    %56 = vector.broadcast %cst_38 : f32 to vector<32x128xf32>
    %57 = arith.maximumf %55, %56 : vector<32x128xf32>
    %58 = vector.broadcast %8 : vector<32x1xf32> to vector<32x128xf32>
    %59 = arith.mulf %58, %57 : vector<32x128xf32>
    %cst_39 = arith.constant dense<0.000000e+00> : vector<128xf32>
    %60 = vector.multi_reduction <add>, %59, %cst_39 [0] : vector<32x128xf32> to vector<128xf32>
    %61 = vector.shape_cast %60 : vector<128xf32> to vector<1x128xf32>
    %c4 = arith.constant 4 : index
    %c0_40 = arith.constant 0 : index
    %c0_41 = arith.constant 0 : index
    %62 = vector.load %arg2[%c4, %c0_40, %c0_41] : memref<8x32x128xbf16, #tpu.memory_space<vmem>>, vector<1x32x128xbf16>
    %63 = vector.shape_cast %62 : vector<1x32x128xbf16> to vector<32x128xbf16>
    %64 = arith.extf %63 : vector<32x128xbf16> to vector<32x128xf32>
    %cst_42 = arith.constant dense<0.000000e+00> : vector<32x128xf32>
    %65 = tpu.matmul %2, %64, %cst_42 {dimension_numbers = #tpu.dot_dimension_numbers<[1], [0], [0], [1], [0, 0, 1, 1], [], []>} : vector<32x32xf32>, vector<32x128xf32>, vector<32x128xf32> -> vector<32x128xf32>
    %66 = vector.broadcast %6 : vector<32x1xf32> to vector<32x128xf32>
    %67 = arith.addf %65, %66 : vector<32x128xf32>
    %cst_43 = arith.constant 0.000000e+00 : f32
    %68 = vector.broadcast %cst_43 : f32 to vector<32x128xf32>
    %69 = arith.maximumf %67, %68 : vector<32x128xf32>
    %70 = vector.broadcast %8 : vector<32x1xf32> to vector<32x128xf32>
    %71 = arith.mulf %70, %69 : vector<32x128xf32>
    %cst_44 = arith.constant dense<0.000000e+00> : vector<128xf32>
    %72 = vector.multi_reduction <add>, %71, %cst_44 [0] : vector<32x128xf32> to vector<128xf32>
    %73 = vector.shape_cast %72 : vector<128xf32> to vector<1x128xf32>
    %c5 = arith.constant 5 : index
    %c0_45 = arith.constant 0 : index
    %c0_46 = arith.constant 0 : index
    %74 = vector.load %arg2[%c5, %c0_45, %c0_46] : memref<8x32x128xbf16, #tpu.memory_space<vmem>>, vector<1x32x128xbf16>
    %75 = vector.shape_cast %74 : vector<1x32x128xbf16> to vector<32x128xbf16>
    %76 = arith.extf %75 : vector<32x128xbf16> to vector<32x128xf32>
    %cst_47 = arith.constant dense<0.000000e+00> : vector<32x128xf32>
    %77 = tpu.matmul %2, %76, %cst_47 {dimension_numbers = #tpu.dot_dimension_numbers<[1], [0], [0], [1], [0, 0, 1, 1], [], []>} : vector<32x32xf32>, vector<32x128xf32>, vector<32x128xf32> -> vector<32x128xf32>
    %78 = vector.broadcast %6 : vector<32x1xf32> to vector<32x128xf32>
    %79 = arith.addf %77, %78 : vector<32x128xf32>
    %cst_48 = arith.constant 0.000000e+00 : f32
    %80 = vector.broadcast %cst_48 : f32 to vector<32x128xf32>
    %81 = arith.maximumf %79, %80 : vector<32x128xf32>
    %82 = vector.broadcast %8 : vector<32x1xf32> to vector<32x128xf32>
    %83 = arith.mulf %82, %81 : vector<32x128xf32>
    %cst_49 = arith.constant dense<0.000000e+00> : vector<128xf32>
    %84 = vector.multi_reduction <add>, %83, %cst_49 [0] : vector<32x128xf32> to vector<128xf32>
    %85 = vector.shape_cast %84 : vector<128xf32> to vector<1x128xf32>
    %c6 = arith.constant 6 : index
    %c0_50 = arith.constant 0 : index
    %c0_51 = arith.constant 0 : index
    %86 = vector.load %arg2[%c6, %c0_50, %c0_51] : memref<8x32x128xbf16, #tpu.memory_space<vmem>>, vector<1x32x128xbf16>
    %87 = vector.shape_cast %86 : vector<1x32x128xbf16> to vector<32x128xbf16>
    %88 = arith.extf %87 : vector<32x128xbf16> to vector<32x128xf32>
    %cst_52 = arith.constant dense<0.000000e+00> : vector<32x128xf32>
    %89 = tpu.matmul %2, %88, %cst_52 {dimension_numbers = #tpu.dot_dimension_numbers<[1], [0], [0], [1], [0, 0, 1, 1], [], []>} : vector<32x32xf32>, vector<32x128xf32>, vector<32x128xf32> -> vector<32x128xf32>
    %90 = vector.broadcast %6 : vector<32x1xf32> to vector<32x128xf32>
    %91 = arith.addf %89, %90 : vector<32x128xf32>
    %cst_53 = arith.constant 0.000000e+00 : f32
    %92 = vector.broadcast %cst_53 : f32 to vector<32x128xf32>
    %93 = arith.maximumf %91, %92 : vector<32x128xf32>
    %94 = vector.broadcast %8 : vector<32x1xf32> to vector<32x128xf32>
    %95 = arith.mulf %94, %93 : vector<32x128xf32>
    %cst_54 = arith.constant dense<0.000000e+00> : vector<128xf32>
    %96 = vector.multi_reduction <add>, %95, %cst_54 [0] : vector<32x128xf32> to vector<128xf32>
    %97 = vector.shape_cast %96 : vector<128xf32> to vector<1x128xf32>
    %c7 = arith.constant 7 : index
    %c0_55 = arith.constant 0 : index
    %c0_56 = arith.constant 0 : index
    %98 = vector.load %arg2[%c7, %c0_55, %c0_56] : memref<8x32x128xbf16, #tpu.memory_space<vmem>>, vector<1x32x128xbf16>
    %99 = vector.shape_cast %98 : vector<1x32x128xbf16> to vector<32x128xbf16>
    %100 = arith.extf %99 : vector<32x128xbf16> to vector<32x128xf32>
    %cst_57 = arith.constant dense<0.000000e+00> : vector<32x128xf32>
    %101 = tpu.matmul %2, %100, %cst_57 {dimension_numbers = #tpu.dot_dimension_numbers<[1], [0], [0], [1], [0, 0, 1, 1], [], []>} : vector<32x32xf32>, vector<32x128xf32>, vector<32x128xf32> -> vector<32x128xf32>
    %102 = vector.broadcast %6 : vector<32x1xf32> to vector<32x128xf32>
    %103 = arith.addf %101, %102 : vector<32x128xf32>
    %cst_58 = arith.constant 0.000000e+00 : f32
    %104 = vector.broadcast %cst_58 : f32 to vector<32x128xf32>
    %105 = arith.maximumf %103, %104 : vector<32x128xf32>
    %106 = vector.broadcast %8 : vector<32x1xf32> to vector<32x128xf32>
    %107 = arith.mulf %106, %105 : vector<32x128xf32>
    %cst_59 = arith.constant dense<0.000000e+00> : vector<128xf32>
    %108 = vector.multi_reduction <add>, %107, %cst_59 [0] : vector<32x128xf32> to vector<128xf32>
    %109 = vector.shape_cast %108 : vector<128xf32> to vector<1x128xf32>
    %110 = tpu.concatenate %25, %37, %49, %61, %73, %85, %97, %109 in 0 : vector<1x128xf32>, vector<1x128xf32>, vector<1x128xf32>, vector<1x128xf32>, vector<1x128xf32>, vector<1x128xf32>, vector<1x128xf32>, vector<1x128xf32> -> vector<8x128xf32>
    %111 = tpu.iota {dimensions = array<i32: 0>} : vector<8x128xi32>
    %112 = vector.broadcast %0 : vector<1x128xi32> to vector<8x128xi32>
    %113 = arith.cmpi slt, %111, %112 : vector<8x128xi32>
    %cst_60 = arith.constant -1.000000e+30 : f32
    %114 = vector.broadcast %cst_60 : f32 to vector<8x128xf32>
    %115 = arith.select %113, %110, %114 : vector<8x128xi1>, vector<8x128xf32>
    %cst_61 = arith.constant dense<0xFF800000> : vector<128xf32>
    %116 = vector.multi_reduction <maximumf>, %115, %cst_61 [0] : vector<8x128xf32> to vector<128xf32>
    %117 = vector.shape_cast %116 : vector<128xf32> to vector<1x128xf32>
    %118 = vector.broadcast %117 : vector<1x128xf32> to vector<8x128xf32>
    %119 = arith.subf %115, %118 : vector<8x128xf32>
    %120 = math.exp %119 : vector<8x128xf32>
    %cst_62 = arith.constant 0.000000e+00 : f32
    %121 = vector.broadcast %cst_62 : f32 to vector<8x128xf32>
    %122 = arith.select %113, %120, %121 : vector<8x128xi1>, vector<8x128xf32>
    %cst_63 = arith.constant dense<0.000000e+00> : vector<128xf32>
    %123 = vector.multi_reduction <add>, %122, %cst_63 [0] : vector<8x128xf32> to vector<128xf32>
    %124 = vector.shape_cast %123 : vector<128xf32> to vector<1x128xf32>
    %cst_64 = arith.constant 0.000000e+00 : f32
    %125 = vector.broadcast %cst_64 : f32 to vector<1x128xf32>
    %126 = arith.cmpf ogt, %124, %125 : vector<1x128xf32>
    %cst_65 = arith.constant 1.000000e+00 : f32
    %127 = vector.broadcast %cst_65 : f32 to vector<1x128xf32>
    %128 = arith.select %126, %124, %127 : vector<1x128xi1>, vector<1x128xf32>
    %129 = tpu.reciprocal %128 {approx = true} : vector<1x128xf32> -> vector<1x128xf32>
    %130 = vector.extract_strided_slice %122 {offsets = [0, 0], sizes = [1, 128], strides = [1, 1]} : vector<8x128xf32> to vector<1x128xf32>
    %c0_66 = arith.constant 0 : index
    %c0_67 = arith.constant 0 : index
    %c0_68 = arith.constant 0 : index
    %131 = vector.load %arg2[%c0_66, %c0_67, %c0_68] : memref<8x32x128xbf16, #tpu.memory_space<vmem>>, vector<1x32x128xbf16>
    %132 = vector.shape_cast %131 : vector<1x32x128xbf16> to vector<32x128xbf16>
    %133 = arith.extf %132 : vector<32x128xbf16> to vector<32x128xf32>
    %134 = vector.broadcast %130 : vector<1x128xf32> to vector<32x128xf32>
    %135 = arith.mulf %134, %133 : vector<32x128xf32>
    %136 = vector.extract_strided_slice %122 {offsets = [1, 0], sizes = [1, 128], strides = [1, 1]} : vector<8x128xf32> to vector<1x128xf32>
    %c1_69 = arith.constant 1 : index
    %c0_70 = arith.constant 0 : index
    %c0_71 = arith.constant 0 : index
    %137 = vector.load %arg2[%c1_69, %c0_70, %c0_71] : memref<8x32x128xbf16, #tpu.memory_space<vmem>>, vector<1x32x128xbf16>
    %138 = vector.shape_cast %137 : vector<1x32x128xbf16> to vector<32x128xbf16>
    %139 = arith.extf %138 : vector<32x128xbf16> to vector<32x128xf32>
    %140 = vector.broadcast %136 : vector<1x128xf32> to vector<32x128xf32>
    %141 = arith.mulf %140, %139 : vector<32x128xf32>
    %142 = arith.addf %135, %141 : vector<32x128xf32>
    %143 = vector.extract_strided_slice %122 {offsets = [2, 0], sizes = [1, 128], strides = [1, 1]} : vector<8x128xf32> to vector<1x128xf32>
    %c2_72 = arith.constant 2 : index
    %c0_73 = arith.constant 0 : index
    %c0_74 = arith.constant 0 : index
    %144 = vector.load %arg2[%c2_72, %c0_73, %c0_74] : memref<8x32x128xbf16, #tpu.memory_space<vmem>>, vector<1x32x128xbf16>
    %145 = vector.shape_cast %144 : vector<1x32x128xbf16> to vector<32x128xbf16>
    %146 = arith.extf %145 : vector<32x128xbf16> to vector<32x128xf32>
    %147 = vector.broadcast %143 : vector<1x128xf32> to vector<32x128xf32>
    %148 = arith.mulf %147, %146 : vector<32x128xf32>
    %149 = arith.addf %142, %148 : vector<32x128xf32>
    %150 = vector.extract_strided_slice %122 {offsets = [3, 0], sizes = [1, 128], strides = [1, 1]} : vector<8x128xf32> to vector<1x128xf32>
    %c3_75 = arith.constant 3 : index
    %c0_76 = arith.constant 0 : index
    %c0_77 = arith.constant 0 : index
    %151 = vector.load %arg2[%c3_75, %c0_76, %c0_77] : memref<8x32x128xbf16, #tpu.memory_space<vmem>>, vector<1x32x128xbf16>
    %152 = vector.shape_cast %151 : vector<1x32x128xbf16> to vector<32x128xbf16>
    %153 = arith.extf %152 : vector<32x128xbf16> to vector<32x128xf32>
    %154 = vector.broadcast %150 : vector<1x128xf32> to vector<32x128xf32>
    %155 = arith.mulf %154, %153 : vector<32x128xf32>
    %156 = arith.addf %149, %155 : vector<32x128xf32>
    %157 = vector.extract_strided_slice %122 {offsets = [4, 0], sizes = [1, 128], strides = [1, 1]} : vector<8x128xf32> to vector<1x128xf32>
    %c4_78 = arith.constant 4 : index
    %c0_79 = arith.constant 0 : index
    %c0_80 = arith.constant 0 : index
    %158 = vector.load %arg2[%c4_78, %c0_79, %c0_80] : memref<8x32x128xbf16, #tpu.memory_space<vmem>>, vector<1x32x128xbf16>
    %159 = vector.shape_cast %158 : vector<1x32x128xbf16> to vector<32x128xbf16>
    %160 = arith.extf %159 : vector<32x128xbf16> to vector<32x128xf32>
    %161 = vector.broadcast %157 : vector<1x128xf32> to vector<32x128xf32>
    %162 = arith.mulf %161, %160 : vector<32x128xf32>
    %163 = arith.addf %156, %162 : vector<32x128xf32>
    %164 = vector.extract_strided_slice %122 {offsets = [5, 0], sizes = [1, 128], strides = [1, 1]} : vector<8x128xf32> to vector<1x128xf32>
    %c5_81 = arith.constant 5 : index
    %c0_82 = arith.constant 0 : index
    %c0_83 = arith.constant 0 : index
    %165 = vector.load %arg2[%c5_81, %c0_82, %c0_83] : memref<8x32x128xbf16, #tpu.memory_space<vmem>>, vector<1x32x128xbf16>
    %166 = vector.shape_cast %165 : vector<1x32x128xbf16> to vector<32x128xbf16>
    %167 = arith.extf %166 : vector<32x128xbf16> to vector<32x128xf32>
    %168 = vector.broadcast %164 : vector<1x128xf32> to vector<32x128xf32>
    %169 = arith.mulf %168, %167 : vector<32x128xf32>
    %170 = arith.addf %163, %169 : vector<32x128xf32>
    %171 = vector.extract_strided_slice %122 {offsets = [6, 0], sizes = [1, 128], strides = [1, 1]} : vector<8x128xf32> to vector<1x128xf32>
    %c6_84 = arith.constant 6 : index
    %c0_85 = arith.constant 0 : index
    %c0_86 = arith.constant 0 : index
    %172 = vector.load %arg2[%c6_84, %c0_85, %c0_86] : memref<8x32x128xbf16, #tpu.memory_space<vmem>>, vector<1x32x128xbf16>
    %173 = vector.shape_cast %172 : vector<1x32x128xbf16> to vector<32x128xbf16>
    %174 = arith.extf %173 : vector<32x128xbf16> to vector<32x128xf32>
    %175 = vector.broadcast %171 : vector<1x128xf32> to vector<32x128xf32>
    %176 = arith.mulf %175, %174 : vector<32x128xf32>
    %177 = arith.addf %170, %176 : vector<32x128xf32>
    %178 = vector.extract_strided_slice %122 {offsets = [7, 0], sizes = [1, 128], strides = [1, 1]} : vector<8x128xf32> to vector<1x128xf32>
    %c7_87 = arith.constant 7 : index
    %c0_88 = arith.constant 0 : index
    %c0_89 = arith.constant 0 : index
    %179 = vector.load %arg2[%c7_87, %c0_88, %c0_89] : memref<8x32x128xbf16, #tpu.memory_space<vmem>>, vector<1x32x128xbf16>
    %180 = vector.shape_cast %179 : vector<1x32x128xbf16> to vector<32x128xbf16>
    %181 = arith.extf %180 : vector<32x128xbf16> to vector<32x128xf32>
    %182 = vector.broadcast %178 : vector<1x128xf32> to vector<32x128xf32>
    %183 = arith.mulf %182, %181 : vector<32x128xf32>
    %184 = arith.addf %177, %183 : vector<32x128xf32>
    %185 = vector.broadcast %129 : vector<1x128xf32> to vector<32x128xf32>
    %186 = arith.mulf %184, %185 : vector<32x128xf32>
    %cst_90 = arith.constant dense<0.000000e+00> : vector<32x128xf32>
    %187 = tpu.matmul %4, %186, %cst_90 {dimension_numbers = #tpu.dot_dimension_numbers<[1], [0], [0], [1], [0, 0, 1, 1], [], []>} : vector<32x32xf32>, vector<32x128xf32>, vector<32x128xf32> -> vector<32x128xf32>
    %188 = vector.broadcast %10 : vector<32x1xf32> to vector<32x128xf32>
    %189 = arith.addf %187, %188 : vector<32x128xf32>
    %cst_91 = arith.constant 0.000000e+00 : f32
    %190 = vector.broadcast %cst_91 : f32 to vector<32x128xf32>
    %191 = arith.maximumf %189, %190 : vector<32x128xf32>
    %192 = vector.broadcast %12 : vector<32x1xf32> to vector<32x128xf32>
    %193 = arith.mulf %192, %191 : vector<32x128xf32>
    %cst_92 = arith.constant dense<0.000000e+00> : vector<128xf32>
    %194 = vector.multi_reduction <add>, %193, %cst_92 [0] : vector<32x128xf32> to vector<128xf32>
    %195 = vector.shape_cast %194 : vector<128xf32> to vector<1x128xf32>
    %196 = vector.broadcast %13 : f32 to vector<1x128xf32>
    %197 = arith.addf %195, %196 : vector<1x128xf32>
    %c0_i32 = arith.constant 0 : i32
    %198 = vector.broadcast %c0_i32 : i32 to vector<1x128xi32>
    %199 = arith.cmpi sgt, %0, %198 : vector<1x128xi32>
    %cst_93 = arith.constant 0.000000e+00 : f32
    %200 = vector.broadcast %cst_93 : f32 to vector<1x128xf32>
    %201 = arith.select %199, %197, %200 : vector<1x128xi1>, vector<1x128xf32>
    %202 = vector.shape_cast %201 : vector<1x128xf32> to vector<1x1x128xf32>
    %c0_94 = arith.constant 0 : index
    %c0_95 = arith.constant 0 : index
    %c0_96 = arith.constant 0 : index
    %203 = vector.load %arg6[%c0_94, %c0_95, %c0_96] : memref<1x1x128xf32, #tpu.memory_space<vmem>>, vector<1x1x128xf32>
    tpu.vector_store %arg6[%c0_94, %c0_95, %c0_96], %202 {strides = array<i32>} : memref<1x1x128xf32, #tpu.memory_space<vmem>>, vector<1x1x128xf32>,
    return
  }
  func.func @transform_0(%arg0: i32) -> (i32, i32) {
    %c0_i32 = arith.constant 0 : i32
    %c0_i32_0 = arith.constant 0 : i32
    return %c0_i32, %arg0 : i32, i32
  }
  func.func @transform_1(%arg0: i32) -> (i32, i32, i32) {
    %c0_i32 = arith.constant 0 : i32
    %c0_i32_0 = arith.constant 0 : i32
    %c0_i32_1 = arith.constant 0 : i32
    return %c0_i32, %c0_i32_0, %arg0 : i32, i32, i32
  }
  func.func @transform_2(%arg0: i32) -> (i32, i32, i32) {
    %c0_i32 = arith.constant 0 : i32
    %c0_i32_0 = arith.constant 0 : i32
    %c0_i32_1 = arith.constant 0 : i32
    %c0_i32_2 = arith.constant 0 : i32
    return %c0_i32, %c0_i32_0, %c0_i32_1 : i32, i32, i32
  }
  func.func @transform_3(%arg0: i32) -> (i32, i32, i32) {
    %c0_i32 = arith.constant 0 : i32
    %c0_i32_0 = arith.constant 0 : i32
    %c0_i32_1 = arith.constant 0 : i32
    %c0_i32_2 = arith.constant 0 : i32
    return %c0_i32, %c0_i32_0, %c0_i32_1 : i32, i32, i32
  }
  func.func @transform_4(%arg0: i32) -> i32 {
    %c0_i32 = arith.constant 0 : i32
    %c0_i32_0 = arith.constant 0 : i32
    return %c0_i32 : i32
  }
  func.func @transform_5(%arg0: i32) -> (i32, i32, i32) {
    %c0_i32 = arith.constant 0 : i32
    %c0_i32_0 = arith.constant 0 : i32
    %c0_i32_1 = arith.constant 0 : i32
    return %arg0, %c0_i32, %c0_i32_0 : i32, i32, i32
  }
}

</mosaic_0001>

<llo_original>
// kernel: tpu_custom_call.1
$region0: #{tpu_custom_call.1}
  #allocation0 [shape = 'u32[]', space=smem, size = 0x4, offset = 0x4, fixed_abs, tag = 'smem constant byte address 0x4 - core index']
  #allocation1 [shape = 'u32[144,128]{1,0:T(1,128)}', space=vmem, size = 0x12000, scoped, tag = 'internal scratch']
  %s0 = inlined_call_operand.vmem [shape: s32[1,128], index: 0, kind: input, shape index: {}]
  %s1 = inlined_call_operand.vmem [shape: bf16[8,32,128], index: 1, kind: input, shape index: {}]
  %s2 = inlined_call_operand.hbm [shape: f32[2,32,32], index: 2, kind: input, shape index: {}]
  %s3 = inlined_call_operand.vmem [shape: f32[4,32,1], index: 3, kind: input, shape index: {}]
  %s4 = inlined_call_operand.vmem [shape: f32[2], index: 4, kind: input, shape index: {}]
  %s5 = inlined_call_operand.hbm [shape: f32[1,1,128], index: 5, kind: output, shape index: {}]
  %s6 = sld [smem:[#allocation0]]
  $region38: #{tpu_custom_call.1} parent=0
    _
  %s8 = ssub.s32 1, %s6
  %s9 = scalar_select 0, %s8, %s6
  $region1: #{tpu_custom_call.1} parent=0
    #allocation2 [shape = 'u8[32768]{0}', space=vmem, size = 0x8000, scoped, tag = 'input window, operand 2, single buffered']
    #allocation3 [shape = 's32[1]{0}', space=sflag, size = 0x4, scoped, tag = 'scoped memory for tpu_custom_call.1']
    #allocation4 [shape = 's32[1]{0}', space=sflag, size = 0x4, scoped, tag = 'scoped memory for tpu_custom_call.1']
    #allocation5 [shape = 's32[1]{0}', space=sflag, size = 0x4, scoped, tag = 'scoped memory for tpu_custom_call.1']
    #allocation6 [shape = 'u8[512]{0}', space=smem, size = 0x200, scoped, tag = 'input window, operand 4, single buffered']
    #allocation7 [shape = 'u8[512]{0}', space=vmem, size = 0x400, scoped, tag = 'output window, operand 0, single buffered']
    %10 = vsyncpa [#allocation3], 0
    %11 = vsyncpa [#allocation5], 0
    %12 = vsyncpa [#allocation4], 0
    // Predicated region
    $region2: #{tpu_custom_call.1} parent=1 // pred_check
      _
    $region3: #{tpu_custom_call.1} parent=1 // pred_check_branch
      %14 = sbr.rel (0) target = $region5
    $region4: #{tpu_custom_call.1} parent=1 // pred_region
      _
    $region5: #{tpu_custom_call.1} parent=1 // pred_fallthru
      _
    // Predicated region
    $region6: #{tpu_custom_call.1} parent=1 // pred_check
      _
    $region7: #{tpu_custom_call.1} parent=1 // pred_check_branch
      %16 = sbr.rel (0) target = $region9
    $region8: #{tpu_custom_call.1} parent=1 // pred_region
      _
    $region9: #{tpu_custom_call.1} parent=1 // pred_fallthru
      _
    // Predicated region
    $region10: #{tpu_custom_call.1} parent=1 // pred_check
      _
    $region11: #{tpu_custom_call.1} parent=1 // pred_check_branch
      %18 = sbr.rel (0) target = $region13
    $region12: #{tpu_custom_call.1} parent=1 // pred_region
      %s20 = ssub.s32 1024, 1024
      %21 = vsyncadd [#allocation3], %s20
      %s22 = sshll.u32 [#allocation2], 4
      %s23 = int_to_ptr.vmem [resolvable:$true] %s22
      %28 = dma.hbm_to_vmem [thread:$0]  %s2, 1024, %s23, [#allocation3], 128, 128, 8
    $region13: #{tpu_custom_call.1} parent=1 // pred_fallthru
      _
    // Predicated region
    $region14: #{tpu_custom_call.1} parent=1 // pred_check
      _
    $region15: #{tpu_custom_call.1} parent=1 // pred_check_branch
      %30 = sbr.rel (0) target = $region17
    $region16: #{tpu_custom_call.1} parent=1 // pred_region
      _
    $region17: #{tpu_custom_call.1} parent=1 // pred_fallthru
      _
    // Predicated region
    $region18: #{tpu_custom_call.1} parent=1 // pred_check
      _
    $region19: #{tpu_custom_call.1} parent=1 // pred_check_branch
      %32 = sbr.rel (0) target = $region21
    $region20: #{tpu_custom_call.1} parent=1 // pred_region
      %s34 = ssub.s32 16, 16
      %35 = vsyncadd [#allocation5], %s34
      %s37 = sshll.u32 %s4, 4
      %s38 = int_to_ptr.vmem [resolvable:$true] %s37
      %40 = dma.vmem_to_smem %s38, 16, [#allocation6], [#allocation5]
    $region21: #{tpu_custom_call.1} parent=1 // pred_fallthru
      _
    // Predicated region
    $region22: #{tpu_custom_call.1} parent=1 // pred_check
      _
    $region23: #{tpu_custom_call.1} parent=1 // pred_check_branch
      %42 = sbr.rel (0) target = $region25
    $region24: #{tpu_custom_call.1} parent=1 // pred_region
      %43 = dma.done [#allocation3], 1024
    $region25: #{tpu_custom_call.1} parent=1 // pred_fallthru
      _
    // Predicated region
    $region26: #{tpu_custom_call.1} parent=1 // pred_check
      _
    $region27: #{tpu_custom_call.1} parent=1 // pred_check_branch
      %45 = sbr.rel (0) target = $region29
    $region28: #{tpu_custom_call.1} parent=1 // pred_region
      %46 = dma.done [#allocation5], 16
    $region29: #{tpu_custom_call.1} parent=1 // pred_fallthru
      _
    %47 = sfence
    %v48 = vld [vmem:[%s0] sm:$0x1]
    %v49 = vld [vmem:[#allocation2] sm:$0xff]
    %v50 = vld [vmem:[#allocation2 + $0x8] sm:$0xff]
    %v51 = vld [vmem:[#allocation2 + $0x10] sm:$0xff]
    %v52 = vld [vmem:[#allocation2 + $0x18] sm:$0xff]
    %s53 = scalar_lea.vmem [#allocation2], 32
    %v54 = vld [vmem:[%s53] sm:$0xff]
    %v55 = vld [vmem:[%s53 + $0x8] sm:$0xff]
    %v56 = vld [vmem:[%s53 + $0x10] sm:$0xff]
    %v57 = vld [vmem:[%s53 + $0x18] sm:$0xff]
    %v58 = vld [vmem:[%s3] sm:$0xff]
    %v59 = vld [vmem:[%s3 + $0x8] sm:$0xff]
    %v60 = vld [vmem:[%s3 + $0x10] sm:$0xff]
    %v61 = vld [vmem:[%s3 + $0x18] sm:$0xff]
    %s62 = scalar_lea.vmem %s3, 32
    %v63 = vld [vmem:[%s62] sm:$0xff]
    %v64 = vld [vmem:[%s62 + $0x8] sm:$0xff]
    %v65 = vld [vmem:[%s62 + $0x10] sm:$0xff]
    %v66 = vld [vmem:[%s62 + $0x18] sm:$0xff]
    %s67 = scalar_lea.vmem %s3, 64
    %v68 = vld [vmem:[%s67] sm:$0xff]
    %v69 = vld [vmem:[%s67 + $0x8] sm:$0xff]
    %v70 = vld [vmem:[%s67 + $0x10] sm:$0xff]
    %v71 = vld [vmem:[%s67 + $0x18] sm:$0xff]
    %s72 = scalar_lea.vmem %s3, 96
    %v73 = vld [vmem:[%s72] sm:$0xff]
    %v74 = vld [vmem:[%s72 + $0x8] sm:$0xff]
    %v75 = vld [vmem:[%s72 + $0x10] sm:$0xff]
    %v76 = vld [vmem:[%s72 + $0x18] sm:$0xff]
    %s77 = sld [smem:[#allocation6 + $0x1]]
    %v78 = vld [vmem:[%s1] sm:$0xf]
    %v79 = vld [vmem:[%s1 + $0x4] sm:$0xf]
    %v80 = vld [vmem:[%s1 + $0x8] sm:$0xf]
    %v81 = vld [vmem:[%s1 + $0xc] sm:$0xf]
    %v82 = vunpack.c.l.bf16 %v78
    %v83 = vunpack.c.l.bf16 %v79
    %v84 = vunpack.c.l.bf16 %v80
    %v85 = vunpack.c.l.bf16 %v81
    %87 = vset.pattern.permute.xlu0 0
    %88 = vperm.xlu0 %87, %v58
    %v89 = vpop.permute.xlu0 %88
    %92 = vset.pattern.permute.xlu0 0
    %93 = vperm.xlu0 %92, %v59
    %v94 = vpop.permute.xlu0 %93
    %97 = vset.pattern.permute.xlu0 0
    %98 = vperm.xlu0 %97, %v60
    %v99 = vpop.permute.xlu0 %98
    %102 = vset.pattern.permute.xlu0 0
    %103 = vperm.xlu0 %102, %v61
    %v104 = vpop.permute.xlu0 %103
    %vm106 = vcmask 261120
    %v108 = vsel %vm106, %v49, 0
    %v111 = vsel %vm106, %v50, 0
    %v114 = vsel %vm106, %v51, 0
    %v117 = vsel %vm106, %v52, 0
    %119 = vmatprep.subr.mxu0 0.0
    %120 = vmatpush1.msra.mxu0 %v82
    %121 = vmatprep.subr.mxu0 0.0
    %122 = vmatpush1.msra.mxu0 %v83
    %123 = vmatprep.subr.mxu0 0.0
    %124 = vmatpush1.msra.mxu0 %v84
    %125 = vmatprep.subr.mxu0 0.0
    %126 = vmatpush1.msra.mxu0 %v85
    %127 = vmatprep.subr.mxu0 0.0
    %128 = vmatpush1.msra.mxu0 0.0
    %129 = vmatprep.subr.mxu0 0.0
    %130 = vmatpush1.msra.mxu0 0.0
    %131 = vmatprep.subr.mxu0 0.0
    %132 = vmatpush1.msra.mxu0 0.0
    %133 = vmatprep.subr.mxu0 0.0
    %134 = vmatpush1.msra.mxu0 0.0
    %135 = vmatprep.subr.mxu0 0.0
    %136 = vmatpush1.msra.mxu0 0.0
    %137 = vmatprep.subr.mxu0 0.0
    %138 = vmatpush1.msra.mxu0 0.0
    %139 = vmatprep.subr.mxu0 0.0
    %140 = vmatpush1.msra.mxu0 0.0
    %141 = vmatprep.subr.mxu0 0.0
    %142 = vmatpush1.msra.mxu0 0.0
    %143 = vmatprep.subr.mxu0 0.0
    %144 = vmatpush1.msra.mxu0 0.0
    %145 = vmatprep.subr.mxu0 0.0
    %146 = vmatpush1.msra.mxu0 0.0
    %147 = vmatprep.subr.mxu0 0.0
    %148 = vmatpush1.msra.mxu0 0.0
    %149 = vmatprep.subr.mxu0 0.0
    %150 = vmatpush1.msra.mxu0 0.0
    %151 = vmatprep.subr.mxu0 0.0
    %152 = vmatpush1.msra.mxu0 0.0
    %153 = vmatprep.subr.mxu0 0.0
    %154 = vmatpush1.msra.mxu0 0.0
    %155 = vmatprep.subr.mxu0 0.0
    %156 = vmatpush1.msra.mxu0 0.0
    %157 = vmatprep.subr.mxu0 0.0
    %158 = vmatpush1.msra.mxu0 0.0
    %159 = vmatprep.subr.mxu0 0.0
    %160 = vmatpush1.msra.mxu0 0.0
    %161 = vmatprep.subr.mxu0 0.0
    %162 = vmatpush1.msra.mxu0 0.0
    %163 = vmatprep.subr.mxu0 0.0
    %164 = vmatpush1.msra.mxu0 0.0
    %165 = vmatprep.subr.mxu0 0.0
    %166 = vmatpush1.msra.mxu0 0.0
    %167 = vmatprep.subr.mxu0 0.0
    %168 = vmatpush1.msra.mxu0 0.0
    %169 = vmatprep.subr.mxu0 0.0
    %170 = vmatpush1.msra.mxu0 0.0
    %171 = vmatprep.subr.mxu0 0.0
    %172 = vmatpush1.msra.mxu0 0.0
    %173 = vmatprep.subr.mxu0 0.0
    %174 = vmatpush1.msra.mxu0 0.0
    %175 = vmatprep.subr.mxu0 0.0
    %176 = vmatpush1.msra.mxu0 0.0
    %177 = vmatprep.subr.mxu0 0.0
    %178 = vmatpush1.msra.mxu0 0.0
    %179 = vmatprep.subr.mxu0 0.0
    %180 = vmatpush1.msra.mxu0 0.0
    %181 = vmatprep.subr.mxu0 0.0
    %182 = vmatpush1.msra.mxu0 0.0
    %183 = vmatprep.mubr.f32.mxu0 0.0
    %184 = vmatmul.mubr.f32.gmra.mrb[0].mxu0 %v108
    %v185 = vpop.f32.mrb[0].mxu0
    %v186 = vadd.f32 %v89, %v185
    %v187 = vpop.f32.mrb[0].mxu0
    %188 = vmatprep.mubr.f32.mxu0 0.0
    %189 = vmatmul.mubr.f32.gmra.mrb[0].mxu0 %v111
    %v190 = vpop.f32.mrb[0].mxu0
    %v191 = vadd.f32 %v94, %v190
    %v192 = vpop.f32.mrb[0].mxu0
    %193 = vmatprep.mubr.f32.mxu0 0.0
    %194 = vmatmul.mubr.f32.gmra.mrb[0].mxu0 %v114
    %v195 = vpop.f32.mrb[0].mxu0
    %v196 = vadd.f32 %v99, %v195
    %v197 = vpop.f32.mrb[0].mxu0
    %198 = vmatprep.mubr.f32.mxu0 0.0
    %199 = vmatmul.mubr.f32.gmra.mrb[0].mxu0 %v117
    %v200 = vpop.f32.mrb[0].mxu0
    %v201 = vadd.f32 %v104, %v200
    %v202 = vpop.f32.mrb[0].mxu0
    %203 = vdwg.mxu0
    %v204 = vmax.f32 %v186, 0.0
    %v205 = vmax.f32 %v191, 0.0
    %v206 = vmax.f32 %v196, 0.0
    %v207 = vmax.f32 %v201, 0.0
    %209 = vset.pattern.permute.xlu0 0
    %210 = vperm.xlu0 %209, %v63
    %v211 = vpop.permute.xlu0 %210
    %214 = vset.pattern.permute.xlu0 0
    %215 = vperm.xlu0 %214, %v64
    %v216 = vpop.permute.xlu0 %215
    %219 = vset.pattern.permute.xlu0 0
    %220 = vperm.xlu0 %219, %v65
    %v221 = vpop.permute.xlu0 %220
    %224 = vset.pattern.permute.xlu0 0
    %225 = vperm.xlu0 %224, %v66
    %v226 = vpop.permute.xlu0 %225
    %v228 = vmul.f32 %v211, %v204
    %v229 = vmul.f32 %v216, %v205
    %v230 = vmul.f32 %v221, %v206
    %v231 = vmul.f32 %v226, %v207
    %v232 = vadd.f32 %v228, %v229
    %v233 = vadd.f32 %v232, %v230
    %v234 = vadd.f32 %v233, %v231
    %v235 = vrot.slane %v234, 4
    %v236 = vadd.f32 %v234, %v235
    %v237 = vrot.slane %v236, 2
    %v238 = vadd.f32 %v236, %v237
    %v239 = vrot.slane %v238, 1
    %v240 = vadd.f32 %v238, %v239
    %s241 = scalar_lea.vmem %s1, 16
    %v242 = vld [vmem:[%s241] sm:$0xf]
    %v243 = vld [vmem:[%s241 + $0x4] sm:$0xf]
    %v244 = vld [vmem:[%s241 + $0x8] sm:$0xf]
    %v245 = vld [vmem:[%s241 + $0xc] sm:$0xf]
    %v246 = vunpack.c.l.bf16 %v242
    %v247 = vunpack.c.l.bf16 %v243
    %v248 = vunpack.c.l.bf16 %v244
    %v249 = vunpack.c.l.bf16 %v245
    %250 = vmatprep.subr.mxu0 0.0
    %251 = vmatpush1.msra.mxu0 %v246
    %252 = vmatprep.subr.mxu0 0.0
    %253 = vmatpush1.msra.mxu0 %v247
    %254 = vmatprep.subr.mxu0 0.0
    %255 = vmatpush1.msra.mxu0 %v248
    %256 = vmatprep.subr.mxu0 0.0
    %257 = vmatpush1.msra.mxu0 %v249
    %258 = vmatprep.subr.mxu0 0.0
    %259 = vmatpush1.msra.mxu0 0.0
    %260 = vmatprep.subr.mxu0 0.0
    %261 = vmatpush1.msra.mxu0 0.0
    %262 = vmatprep.subr.mxu0 0.0
    %263 = vmatpush1.msra.mxu0 0.0
    %264 = vmatprep.subr.mxu0 0.0
    %265 = vmatpush1.msra.mxu0 0.0
    %266 = vmatprep.subr.mxu0 0.0
    %267 = vmatpush1.msra.mxu0 0.0
    %268 = vmatprep.subr.mxu0 0.0
    %269 = vmatpush1.msra.mxu0 0.0
    %270 = vmatprep.subr.mxu0 0.0
    %271 = vmatpush1.msra.mxu0 0.0
    %272 = vmatprep.subr.mxu0 0.0
    %273 = vmatpush1.msra.mxu0 0.0
    %274 = vmatprep.subr.mxu0 0.0
    %275 = vmatpush1.msra.mxu0 0.0
    %276 = vmatprep.subr.mxu0 0.0
    %277 = vmatpush1.msra.mxu0 0.0
    %278 = vmatprep.subr.mxu0 0.0
    %279 = vmatpush1.msra.mxu0 0.0
    %280 = vmatprep.subr.mxu0 0.0
    %281 = vmatpush1.msra.mxu0 0.0
    %282 = vmatprep.subr.mxu0 0.0
    %283 = vmatpush1.msra.mxu0 0.0
    %284 = vmatprep.subr.mxu0 0.0
    %285 = vmatpush1.msra.mxu0 0.0
    %286 = vmatprep.subr.mxu0 0.0
    %287 = vmatpush1.msra.mxu0 0.0
    %288 = vmatprep.subr.mxu0 0.0
    %289 = vmatpush1.msra.mxu0 0.0
    %290 = vmatprep.subr.mxu0 0.0
    %291 = vmatpush1.msra.mxu0 0.0
    %292 = vmatprep.subr.mxu0 0.0
    %293 = vmatpush1.msra.mxu0 0.0
    %294 = vmatprep.subr.mxu0 0.0
    %295 = vmatpush1.msra.mxu0 0.0
    %296 = vmatprep.subr.mxu0 0.0
    %297 = vmatpush1.msra.mxu0 0.0
    %298 = vmatprep.subr.mxu0 0.0
    %299 = vmatpush1.msra.mxu0 0.0
    %300 = vmatprep.subr.mxu0 0.0
    %301 = vmatpush1.msra.mxu0 0.0
    %302 = vmatprep.subr.mxu0 0.0
    %303 = vmatpush1.msra.mxu0 0.0
    %304 = vmatprep.subr.mxu0 0.0
    %305 = vmatpush1.msra.mxu0 0.0
    %306 = vmatprep.subr.mxu0 0.0
    %307 = vmatpush1.msra.mxu0 0.0
    %308 = vmatprep.subr.mxu0 0.0
    %309 = vmatpush1.msra.mxu0 0.0
    %310 = vmatprep.subr.mxu0 0.0
    %311 = vmatpush1.msra.mxu0 0.0
    %312 = vmatprep.subr.mxu0 0.0
    %313 = vmatpush1.msra.mxu0 0.0
    %314 = vmatprep.mubr.f32.mxu0 0.0
    %315 = vmatmul.mubr.f32.gmra.mrb[0].mxu0 %v108
    %v316 = vpop.f32.mrb[0].mxu0
    %v317 = vadd.f32 %v89, %v316
    %v318 = vpop.f32.mrb[0].mxu0
    %319 = vmatprep.mubr.f32.mxu0 0.0
    %320 = vmatmul.mubr.f32.gmra.mrb[0].mxu0 %v111
    %v321 = vpop.f32.mrb[0].mxu0
    %v322 = vadd.f32 %v94, %v321
    %v323 = vpop.f32.mrb[0].mxu0
    %324 = vmatprep.mubr.f32.mxu0 0.0
    %325 = vmatmul.mubr.f32.gmra.mrb[0].mxu0 %v114
    %v326 = vpop.f32.mrb[0].mxu0
    %v327 = vadd.f32 %v99, %v326
    %v328 = vpop.f32.mrb[0].mxu0
    %329 = vmatprep.mubr.f32.mxu0 0.0
    %330 = vmatmul.mubr.f32.gmra.mrb[0].mxu0 %v117
    %v331 = vpop.f32.mrb[0].mxu0
    %v332 = vadd.f32 %v104, %v331
    %v333 = vpop.f32.mrb[0].mxu0
    %334 = vdwg.mxu0
    %v335 = vmax.f32 %v317, 0.0
    %v336 = vmax.f32 %v322, 0.0
    %v337 = vmax.f32 %v327, 0.0
    %v338 = vmax.f32 %v332, 0.0
    %v339 = vmul.f32 %v211, %v335
    %v340 = vmul.f32 %v216, %v336
    %v341 = vmul.f32 %v221, %v337
    %v342 = vmul.f32 %v226, %v338
    %v343 = vadd.f32 %v339, %v340
    %v344 = vadd.f32 %v343, %v341
    %v345 = vadd.f32 %v344, %v342
    %v346 = vrot.slane %v345, 4
    %v347 = vadd.f32 %v345, %v346
    %v348 = vrot.slane %v347, 2
    %v349 = vadd.f32 %v347, %v348
    %v350 = vrot.slane %v349, 1
    %v351 = vadd.f32 %v349, %v350
    %s352 = scalar_lea.vmem %s1, 32
    %v353 = vld [vmem:[%s352] sm:$0xf]
    %v354 = vld [vmem:[%s352 + $0x4] sm:$0xf]
    %v355 = vld [vmem:[%s352 + $0x8] sm:$0xf]
    %v356 = vld [vmem:[%s352 + $0xc] sm:$0xf]
    %v357 = vunpack.c.l.bf16 %v353
    %v358 = vunpack.c.l.bf16 %v354
    %v359 = vunpack.c.l.bf16 %v355
    %v360 = vunpack.c.l.bf16 %v356
    %361 = vmatprep.subr.mxu0 0.0
    %362 = vmatpush1.msra.mxu0 %v357
    %363 = vmatprep.subr.mxu0 0.0
    %364 = vmatpush1.msra.mxu0 %v358
    %365 = vmatprep.subr.mxu0 0.0
    %366 = vmatpush1.msra.mxu0 %v359
    %367 = vmatprep.subr.mxu0 0.0
    %368 = vmatpush1.msra.mxu0 %v360
    %369 = vmatprep.subr.mxu0 0.0
    %370 = vmatpush1.msra.mxu0 0.0
    %371 = vmatprep.subr.mxu0 0.0
    %372 = vmatpush1.msra.mxu0 0.0
    %373 = vmatprep.subr.mxu0 0.0
    %374 = vmatpush1.msra.mxu0 0.0
    %375 = vmatprep.subr.mxu0 0.0
    %376 = vmatpush1.msra.mxu0 0.0
    %377 = vmatprep.subr.mxu0 0.0
    %378 = vmatpush1.msra.mxu0 0.0
    %379 = vmatprep.subr.mxu0 0.0
    %380 = vmatpush1.msra.mxu0 0.0
    %381 = vmatprep.subr.mxu0 0.0
    %382 = vmatpush1.msra.mxu0 0.0
    %383 = vmatprep.subr.mxu0 0.0
    %384 = vmatpush1.msra.mxu0 0.0
    %385 = vmatprep.subr.mxu0 0.0
    %386 = vmatpush1.msra.mxu0 0.0
    %387 = vmatprep.subr.mxu0 0.0
    %388 = vmatpush1.msra.mxu0 0.0
    %389 = vmatprep.subr.mxu0 0.0
    %390 = vmatpush1.msra.mxu0 0.0
    %391 = vmatprep.subr.mxu0 0.0
    %392 = vmatpush1.msra.mxu0 0.0
    %393 = vmatprep.subr.mxu0 0.0
    %394 = vmatpush1.msra.mxu0 0.0
    %395 = vmatprep.subr.mxu0 0.0
    %396 = vmatpush1.msra.mxu0 0.0
    %397 = vmatprep.subr.mxu0 0.0
    %398 = vmatpush1.msra.mxu0 0.0
    %399 = vmatprep.subr.mxu0 0.0
    %400 = vmatpush1.msra.mxu0 0.0
    %401 = vmatprep.subr.mxu0 0.0
    %402 = vmatpush1.msra.mxu0 0.0
    %403 = vmatprep.subr.mxu0 0.0
    %404 = vmatpush1.msra.mxu0 0.0
    %405 = vmatprep.subr.mxu0 0.0
    %406 = vmatpush1.msra.mxu0 0.0
    %407 = vmatprep.subr.mxu0 0.0
    %408 = vmatpush1.msra.mxu0 0.0
    %409 = vmatprep.subr.mxu0 0.0
    %410 = vmatpush1.msra.mxu0 0.0
    %411 = vmatprep.subr.mxu0 0.0
    %412 = vmatpush1.msra.mxu0 0.0
    %413 = vmatprep.subr.mxu0 0.0
    %414 = vmatpush1.msra.mxu0 0.0
    %415 = vmatprep.subr.mxu0 0.0
    %416 = vmatpush1.msra.mxu0 0.0
    %417 = vmatprep.subr.mxu0 0.0
    %418 = vmatpush1.msra.mxu0 0.0
    %419 = vmatprep.subr.mxu0 0.0
    %420 = vmatpush1.msra.mxu0 0.0
    %421 = vmatprep.subr.mxu0 0.0
    %422 = vmatpush1.msra.mxu0 0.0
    %423 = vmatprep.subr.mxu0 0.0
    %424 = vmatpush1.msra.mxu0 0.0
    %425 = vmatprep.mubr.f32.mxu0 0.0
    %426 = vmatmul.mubr.f32.gmra.mrb[0].mxu0 %v108
    %v427 = vpop.f32.mrb[0].mxu0
    %v428 = vadd.f32 %v89, %v427
    %v429 = vpop.f32.mrb[0].mxu0
    %430 = vmatprep.mubr.f32.mxu0 0.0
    %431 = vmatmul.mubr.f32.gmra.mrb[0].mxu0 %v111
    %v432 = vpop.f32.mrb[0].mxu0
    %v433 = vadd.f32 %v94, %v432
    %v434 = vpop.f32.mrb[0].mxu0
    %435 = vmatprep.mubr.f32.mxu0 0.0
    %436 = vmatmul.mubr.f32.gmra.mrb[0].mxu0 %v114
    %v437 = vpop.f32.mrb[0].mxu0
    %v438 = vadd.f32 %v99, %v437
    %v439 = vpop.f32.mrb[0].mxu0
    %440 = vmatprep.mubr.f32.mxu0 0.0
    %441 = vmatmul.mubr.f32.gmra.mrb[0].mxu0 %v117
    %v442 = vpop.f32.mrb[0].mxu0
    %v443 = vadd.f32 %v104, %v442
    %v444 = vpop.f32.mrb[0].mxu0
    %445 = vdwg.mxu0
    %v446 = vmax.f32 %v428, 0.0
    %v447 = vmax.f32 %v433, 0.0
    %v448 = vmax.f32 %v438, 0.0
    %v449 = vmax.f32 %v443, 0.0
    %v450 = vmul.f32 %v211, %v446
    %v451 = vmul.f32 %v216, %v447
    %v452 = vmul.f32 %v221, %v448
    %v453 = vmul.f32 %v226, %v449
    %v454 = vadd.f32 %v450, %v451
    %v455 = vadd.f32 %v454, %v452
    %v456 = vadd.f32 %v455, %v453
    %v457 = vrot.slane %v456, 4
    %v458 = vadd.f32 %v456, %v457
    %v459 = vrot.slane %v458, 2
    %v460 = vadd.f32 %v458, %v459
    %v461 = vrot.slane %v460, 1
    %v462 = vadd.f32 %v460, %v461
    %s463 = scalar_lea.vmem %s1, 48
    %v464 = vld [vmem:[%s463] sm:$0xf]
    %v465 = vld [vmem:[%s463 + $0x4] sm:$0xf]
    %v466 = vld [vmem:[%s463 + $0x8] sm:$0xf]
    %v467 = vld [vmem:[%s463 + $0xc] sm:$0xf]
    %v468 = vunpack.c.l.bf16 %v464
    %v469 = vunpack.c.l.bf16 %v465
    %v470 = vunpack.c.l.bf16 %v466
    %v471 = vunpack.c.l.bf16 %v467
    %472 = vmatprep.subr.mxu0 0.0
    %473 = vmatpush1.msra.mxu0 %v468
    %474 = vmatprep.subr.mxu0 0.0
    %475 = vmatpush1.msra.mxu0 %v469
    %476 = vmatprep.subr.mxu0 0.0
    %477 = vmatpush1.msra.mxu0 %v470
    %478 = vmatprep.subr.mxu0 0.0
    %479 = vmatpush1.msra.mxu0 %v471
    %480 = vmatprep.subr.mxu0 0.0
    %481 = vmatpush1.msra.mxu0 0.0
    %482 = vmatprep.subr.mxu0 0.0
    %483 = vmatpush1.msra.mxu0 0.0
    %484 = vmatprep.subr.mxu0 0.0
    %485 = vmatpush1.msra.mxu0 0.0
    %486 = vmatprep.subr.mxu0 0.0
    %487 = vmatpush1.msra.mxu0 0.0
    %488 = vmatprep.subr.mxu0 0.0
    %489 = vmatpush1.msra.mxu0 0.0
    %490 = vmatprep.subr.mxu0 0.0
    %491 = vmatpush1.msra.mxu0 0.0
    %492 = vmatprep.subr.mxu0 0.0
    %493 = vmatpush1.msra.mxu0 0.0
    %494 = vmatprep.subr.mxu0 0.0
    %495 = vmatpush1.msra.mxu0 0.0
    %496 = vmatprep.subr.mxu0 0.0
    %497 = vmatpush1.msra.mxu0 0.0
    %498 = vmatprep.subr.mxu0 0.0
    %499 = vmatpush1.msra.mxu0 0.0
    %500 = vmatprep.subr.mxu0 0.0
    %501 = vmatpush1.msra.mxu0 0.0
    %502 = vmatprep.subr.mxu0 0.0
    %503 = vmatpush1.msra.mxu0 0.0
    %504 = vmatprep.subr.mxu0 0.0
    %505 = vmatpush1.msra.mxu0 0.0
    %506 = vmatprep.subr.mxu0 0.0
    %507 = vmatpush1.msra.mxu0 0.0
    %508 = vmatprep.subr.mxu0 0.0
    %509 = vmatpush1.msra.mxu0 0.0
    %510 = vmatprep.subr.mxu0 0.0
    %511 = vmatpush1.msra.mxu0 0.0
    %512 = vmatprep.subr.mxu0 0.0
    %513 = vmatpush1.msra.mxu0 0.0
    %514 = vmatprep.subr.mxu0 0.0
    %515 = vmatpush1.msra.mxu0 0.0
    %516 = vmatprep.subr.mxu0 0.0
    %517 = vmatpush1.msra.mxu0 0.0
    %518 = vmatprep.subr.mxu0 0.0
    %519 = vmatpush1.msra.mxu0 0.0
    %520 = vmatprep.subr.mxu0 0.0
    %521 = vmatpush1.msra.mxu0 0.0
    %522 = vmatprep.subr.mxu0 0.0
    %523 = vmatpush1.msra.mxu0 0.0
    %524 = vmatprep.subr.mxu0 0.0
    %525 = vmatpush1.msra.mxu0 0.0
    %526 = vmatprep.subr.mxu0 0.0
    %527 = vmatpush1.msra.mxu0 0.0
    %528 = vmatprep.subr.mxu0 0.0
    %529 = vmatpush1.msra.mxu0 0.0
    %530 = vmatprep.subr.mxu0 0.0
    %531 = vmatpush1.msra.mxu0 0.0
    %532 = vmatprep.subr.mxu0 0.0
    %533 = vmatpush1.msra.mxu0 0.0
    %534 = vmatprep.subr.mxu0 0.0
    %535 = vmatpush1.msra.mxu0 0.0
    %536 = vmatprep.mubr.f32.mxu0 0.0
    %537 = vmatmul.mubr.f32.gmra.mrb[0].mxu0 %v108
    %v538 = vpop.f32.mrb[0].mxu0
    %v539 = vadd.f32 %v89, %v538
    %v540 = vpop.f32.mrb[0].mxu0
    %541 = vmatprep.mubr.f32.mxu0 0.0
    %542 = vmatmul.mubr.f32.gmra.mrb[0].mxu0 %v111
    %v543 = vpop.f32.mrb[0].mxu0
    %v544 = vadd.f32 %v94, %v543
    %v545 = vpop.f32.mrb[0].mxu0
    %546 = vmatprep.mubr.f32.mxu0 0.0
    %547 = vmatmul.mubr.f32.gmra.mrb[0].mxu0 %v114
    %v548 = vpop.f32.mrb[0].mxu0
    %v549 = vadd.f32 %v99, %v548
    %v550 = vpop.f32.mrb[0].mxu0
    %551 = vmatprep.mubr.f32.mxu0 0.0
    %552 = vmatmul.mubr.f32.gmra.mrb[0].mxu0 %v117
    %v553 = vpop.f32.mrb[0].mxu0
    %v554 = vadd.f32 %v104, %v553
    %v555 = vpop.f32.mrb[0].mxu0
    %556 = vdwg.mxu0
    %v557 = vmax.f32 %v539, 0.0
    %v558 = vmax.f32 %v544, 0.0
    %v559 = vmax.f32 %v549, 0.0
    %v560 = vmax.f32 %v554, 0.0
    %v561 = vmul.f32 %v211, %v557
    %v562 = vmul.f32 %v216, %v558
    %v563 = vmul.f32 %v221, %v559
    %v564 = vmul.f32 %v226, %v560
    %v565 = vadd.f32 %v561, %v562
    %v566 = vadd.f32 %v565, %v563
    %v567 = vadd.f32 %v566, %v564
    %v568 = vrot.slane %v567, 4
    %v569 = vadd.f32 %v567, %v568
    %v570 = vrot.slane %v569, 2
    %v571 = vadd.f32 %v569, %v570
    %v572 = vrot.slane %v571, 1
    %v573 = vadd.f32 %v571, %v572
    %s574 = scalar_lea.vmem %s1, 64
    %v575 = vld [vmem:[%s574] sm:$0xf]
    %v576 = vld [vmem:[%s574 + $0x4] sm:$0xf]
    %v577 = vld [vmem:[%s574 + $0x8] sm:$0xf]
    %v578 = vld [vmem:[%s574 + $0xc] sm:$0xf]
    %v579 = vunpack.c.l.bf16 %v575
    %v580 = vunpack.c.l.bf16 %v576
    %v581 = vunpack.c.l.bf16 %v577
    %v582 = vunpack.c.l.bf16 %v578
    %583 = vmatprep.subr.mxu0 0.0
    %584 = vmatpush1.msra.mxu0 %v579
    %585 = vmatprep.subr.mxu0 0.0
    %586 = vmatpush1.msra.mxu0 %v580
    %587 = vmatprep.subr.mxu0 0.0
    %588 = vmatpush1.msra.mxu0 %v581
    %589 = vmatprep.subr.mxu0 0.0
    %590 = vmatpush1.msra.mxu0 %v582
    %591 = vmatprep.subr.mxu0 0.0
    %592 = vmatpush1.msra.mxu0 0.0
    %593 = vmatprep.subr.mxu0 0.0
    %594 = vmatpush1.msra.mxu0 0.0
    %595 = vmatprep.subr.mxu0 0.0
    %596 = vmatpush1.msra.mxu0 0.0
    %597 = vmatprep.subr.mxu0 0.0
    %598 = vmatpush1.msra.mxu0 0.0
    %599 = vmatprep.subr.mxu0 0.0
    %600 = vmatpush1.msra.mxu0 0.0
    %601 = vmatprep.subr.mxu0 0.0
    %602 = vmatpush1.msra.mxu0 0.0
    %603 = vmatprep.subr.mxu0 0.0
    %604 = vmatpush1.msra.mxu0 0.0
    %605 = vmatprep.subr.mxu0 0.0
    %606 = vmatpush1.msra.mxu0 0.0
    %607 = vmatprep.subr.mxu0 0.0
    %608 = vmatpush1.msra.mxu0 0.0
    %609 = vmatprep.subr.mxu0 0.0
    %610 = vmatpush1.msra.mxu0 0.0
    %611 = vmatprep.subr.mxu0 0.0
    %612 = vmatpush1.msra.mxu0 0.0
    %613 = vmatprep.subr.mxu0 0.0
    %614 = vmatpush1.msra.mxu0 0.0
    %615 = vmatprep.subr.mxu0 0.0
    %616 = vmatpush1.msra.mxu0 0.0
    %617 = vmatprep.subr.mxu0 0.0
    %618 = vmatpush1.msra.mxu0 0.0
    %619 = vmatprep.subr.mxu0 0.0
    %620 = vmatpush1.msra.mxu0 0.0
    %621 = vmatprep.subr.mxu0 0.0
    %622 = vmatpush1.msra.mxu0 0.0
    %623 = vmatprep.subr.mxu0 0.0
    %624 = vmatpush1.msra.mxu0 0.0
    %625 = vmatprep.subr.mxu0 0.0
    %626 = vmatpush1.msra.mxu0 0.0
    %627 = vmatprep.subr.mxu0 0.0
    %628 = vmatpush1.msra.mxu0 0.0
    %629 = vmatprep.subr.mxu0 0.0
    %630 = vmatpush1.msra.mxu0 0.0
    %631 = vmatprep.subr.mxu0 0.0
    %632 = vmatpush1.msra.mxu0 0.0
    %633 = vmatprep.subr.mxu0 0.0
    %634 = vmatpush1.msra.mxu0 0.0
    %635 = vmatprep.subr.mxu0 0.0
    %636 = vmatpush1.msra.mxu0 0.0
    %637 = vmatprep.subr.mxu0 0.0
    %638 = vmatpush1.msra.mxu0 0.0
    %639 = vmatprep.subr.mxu0 0.0
    %640 = vmatpush1.msra.mxu0 0.0
    %641 = vmatprep.subr.mxu0 0.0
    %642 = vmatpush1.msra.mxu0 0.0
    %643 = vmatprep.subr.mxu0 0.0
    %644 = vmatpush1.msra.mxu0 0.0
    %645 = vmatprep.subr.mxu0 0.0
    %646 = vmatpush1.msra.mxu0 0.0
    %647 = vmatprep.mubr.f32.mxu0 0.0
    %648 = vmatmul.mubr.f32.gmra.mrb[0].mxu0 %v108
    %v649 = vpop.f32.mrb[0].mxu0
    %v650 = vadd.f32 %v89, %v649
    %v651 = vpop.f32.mrb[0].mxu0
    %652 = vmatprep.mubr.f32.mxu0 0.0
    %653 = vmatmul.mubr.f32.gmra.mrb[0].mxu0 %v111
    %v654 = vpop.f32.mrb[0].mxu0
    %v655 = vadd.f32 %v94, %v654
    %v656 = vpop.f32.mrb[0].mxu0
    %657 = vmatprep.mubr.f32.mxu0 0.0
    %658 = vmatmul.mubr.f32.gmra.mrb[0].mxu0 %v114
    %v659 = vpop.f32.mrb[0].mxu0
    %v660 = vadd.f32 %v99, %v659
    %v661 = vpop.f32.mrb[0].mxu0
    %662 = vmatprep.mubr.f32.mxu0 0.0
    %663 = vmatmul.mubr.f32.gmra.mrb[0].mxu0 %v117
    %v664 = vpop.f32.mrb[0].mxu0
    %v665 = vadd.f32 %v104, %v664
    %v666 = vpop.f32.mrb[0].mxu0
    %667 = vdwg.mxu0
    %v668 = vmax.f32 %v650, 0.0
    %v669 = vmax.f32 %v655, 0.0
    %v670 = vmax.f32 %v660, 0.0
    %v671 = vmax.f32 %v665, 0.0
    %v672 = vmul.f32 %v211, %v668
    %v673 = vmul.f32 %v216, %v669
    %v674 = vmul.f32 %v221, %v670
    %v675 = vmul.f32 %v226, %v671
    %v676 = vadd.f32 %v672, %v673
    %v677 = vadd.f32 %v676, %v674
    %v678 = vadd.f32 %v677, %v675
    %v679 = vrot.slane %v678, 4
    %v680 = vadd.f32 %v678, %v679
    %v681 = vrot.slane %v680, 2
    %v682 = vadd.f32 %v680, %v681
    %v683 = vrot.slane %v682, 1
    %v684 = vadd.f32 %v682, %v683
    %s685 = scalar_lea.vmem %s1, 80
    %v686 = vld [vmem:[%s685] sm:$0xf]
    %v687 = vld [vmem:[%s685 + $0x4] sm:$0xf]
    %v688 = vld [vmem:[%s685 + $0x8] sm:$0xf]
    %v689 = vld [vmem:[%s685 + $0xc] sm:$0xf]
    %v690 = vunpack.c.l.bf16 %v686
    %v691 = vunpack.c.l.bf16 %v687
    %v692 = vunpack.c.l.bf16 %v688
    %v693 = vunpack.c.l.bf16 %v689
    %694 = vmatprep.subr.mxu0 0.0
    %695 = vmatpush1.msra.mxu0 %v690
    %696 = vmatprep.subr.mxu0 0.0
    %697 = vmatpush1.msra.mxu0 %v691
    %698 = vmatprep.subr.mxu0 0.0
    %699 = vmatpush1.msra.mxu0 %v692
    %700 = vmatprep.subr.mxu0 0.0
    %701 = vmatpush1.msra.mxu0 %v693
    %702 = vmatprep.subr.mxu0 0.0
    %703 = vmatpush1.msra.mxu0 0.0
    %704 = vmatprep.subr.mxu0 0.0
    %705 = vmatpush1.msra.mxu0 0.0
    %706 = vmatprep.subr.mxu0 0.0
    %707 = vmatpush1.msra.mxu0 0.0
    %708 = vmatprep.subr.mxu0 0.0
    %709 = vmatpush1.msra.mxu0 0.0
    %710 = vmatprep.subr.mxu0 0.0
    %711 = vmatpush1.msra.mxu0 0.0
    %712 = vmatprep.subr.mxu0 0.0
    %713 = vmatpush1.msra.mxu0 0.0
    %714 = vmatprep.subr.mxu0 0.0
    %715 = vmatpush1.msra.mxu0 0.0
    %716 = vmatprep.subr.mxu0 0.0
    %717 = vmatpush1.msra.mxu0 0.0
    %718 = vmatprep.subr.mxu0 0.0
    %719 = vmatpush1.msra.mxu0 0.0
    %720 = vmatprep.subr.mxu0 0.0
    %721 = vmatpush1.msra.mxu0 0.0
    %722 = vmatprep.subr.mxu0 0.0
    %723 = vmatpush1.msra.mxu0 0.0
    %724 = vmatprep.subr.mxu0 0.0
    %725 = vmatpush1.msra.mxu0 0.0
    %726 = vmatprep.subr.mxu0 0.0
    %727 = vmatpush1.msra.mxu0 0.0
    %728 = vmatprep.subr.mxu0 0.0
    %729 = vmatpush1.msra.mxu0 0.0
    %730 = vmatprep.subr.mxu0 0.0
    %731 = vmatpush1.msra.mxu0 0.0
    %732 = vmatprep.subr.mxu0 0.0
    %733 = vmatpush1.msra.mxu0 0.0
    %734 = vmatprep.subr.mxu0 0.0
    %735 = vmatpush1.msra.mxu0 0.0
    %736 = vmatprep.subr.mxu0 0.0
    %737 = vmatpush1.msra.mxu0 0.0
    %738 = vmatprep.subr.mxu0 0.0
    %739 = vmatpush1.msra.mxu0 0.0
    %740 = vmatprep.subr.mxu0 0.0
    %741 = vmatpush1.msra.mxu0 0.0
    %742 = vmatprep.subr.mxu0 0.0
    %743 = vmatpush1.msra.mxu0 0.0
    %744 = vmatprep.subr.mxu0 0.0
    %745 = vmatpush1.msra.mxu0 0.0
    %746 = vmatprep.subr.mxu0 0.0
    %747 = vmatpush1.msra.mxu0 0.0
    %748 = vmatprep.subr.mxu0 0.0
    %749 = vmatpush1.msra.mxu0 0.0
    %750 = vmatprep.subr.mxu0 0.0
    %751 = vmatpush1.msra.mxu0 0.0
    %752 = vmatprep.subr.mxu0 0.0
    %753 = vmatpush1.msra.mxu0 0.0
    %754 = vmatprep.subr.mxu0 0.0
    %755 = vmatpush1.msra.mxu0 0.0
    %756 = vmatprep.subr.mxu0 0.0
    %757 = vmatpush1.msra.mxu0 0.0
    %758 = vmatprep.mubr.f32.mxu0 0.0
    %759 = vmatmul.mubr.f32.gmra.mrb[0].mxu0 %v108
    %v760 = vpop.f32.mrb[0].mxu0
    %v761 = vadd.f32 %v89, %v760
    %v762 = vpop.f32.mrb[0].mxu0
    %763 = vmatprep.mubr.f32.mxu0 0.0
    %764 = vmatmul.mubr.f32.gmra.mrb[0].mxu0 %v111
    %v765 = vpop.f32.mrb[0].mxu0
    %v766 = vadd.f32 %v94, %v765
    %v767 = vpop.f32.mrb[0].mxu0
    %768 = vmatprep.mubr.f32.mxu0 0.0
    %769 = vmatmul.mubr.f32.gmra.mrb[0].mxu0 %v114
    %v770 = vpop.f32.mrb[0].mxu0
    %v771 = vadd.f32 %v99, %v770
    %v772 = vpop.f32.mrb[0].mxu0
    %773 = vmatprep.mubr.f32.mxu0 0.0
    %774 = vmatmul.mubr.f32.gmra.mrb[0].mxu0 %v117
    %v775 = vpop.f32.mrb[0].mxu0
    %v776 = vadd.f32 %v104, %v775
    %v777 = vpop.f32.mrb[0].mxu0
    %778 = vdwg.mxu0
    %v779 = vmax.f32 %v761, 0.0
    %v780 = vmax.f32 %v766, 0.0
    %v781 = vmax.f32 %v771, 0.0
    %v782 = vmax.f32 %v776, 0.0
    %v783 = vmul.f32 %v211, %v779
    %v784 = vmul.f32 %v216, %v780
    %v785 = vmul.f32 %v221, %v781
    %v786 = vmul.f32 %v226, %v782
    %v787 = vadd.f32 %v783, %v784
    %v788 = vadd.f32 %v787, %v785
    %v789 = vadd.f32 %v788, %v786
    %v790 = vrot.slane %v789, 4
    %v791 = vadd.f32 %v789, %v790
    %v792 = vrot.slane %v791, 2
    %v793 = vadd.f32 %v791, %v792
    %v794 = vrot.slane %v793, 1
    %v795 = vadd.f32 %v793, %v794
    %s796 = scalar_lea.vmem %s1, 96
    %v797 = vld [vmem:[%s796] sm:$0xf]
    %v798 = vld [vmem:[%s796 + $0x4] sm:$0xf]
    %v799 = vld [vmem:[%s796 + $0x8] sm:$0xf]
    %v800 = vld [vmem:[%s796 + $0xc] sm:$0xf]
    %v801 = vunpack.c.l.bf16 %v797
    %v802 = vunpack.c.l.bf16 %v798
    %v803 = vunpack.c.l.bf16 %v799
    %v804 = vunpack.c.l.bf16 %v800
    %805 = vmatprep.subr.mxu0 0.0
    %806 = vmatpush1.msra.mxu0 %v801
    %807 = vmatprep.subr.mxu0 0.0
    %808 = vmatpush1.msra.mxu0 %v802
    %809 = vmatprep.subr.mxu0 0.0
    %810 = vmatpush1.msra.mxu0 %v803
    %811 = vmatprep.subr.mxu0 0.0
    %812 = vmatpush1.msra.mxu0 %v804
    %813 = vmatprep.subr.mxu0 0.0
    %814 = vmatpush1.msra.mxu0 0.0
    %815 = vmatprep.subr.mxu0 0.0
    %816 = vmatpush1.msra.mxu0 0.0
    %817 = vmatprep.subr.mxu0 0.0
    %818 = vmatpush1.msra.mxu0 0.0
    %819 = vmatprep.subr.mxu0 0.0
    %820 = vmatpush1.msra.mxu0 0.0
    %821 = vmatprep.subr.mxu0 0.0
    %822 = vmatpush1.msra.mxu0 0.0
    %823 = vmatprep.subr.mxu0 0.0
    %824 = vmatpush1.msra.mxu0 0.0
    %825 = vmatprep.subr.mxu0 0.0
    %826 = vmatpush1.msra.mxu0 0.0
    %827 = vmatprep.subr.mxu0 0.0
    %828 = vmatpush1.msra.mxu0 0.0
    %829 = vmatprep.subr.mxu0 0.0
    %830 = vmatpush1.msra.mxu0 0.0
    %831 = vmatprep.subr.mxu0 0.0
    %832 = vmatpush1.msra.mxu0 0.0
    %833 = vmatprep.subr.mxu0 0.0
    %834 = vmatpush1.msra.mxu0 0.0
    %835 = vmatprep.subr.mxu0 0.0
    %836 = vmatpush1.msra.mxu0 0.0
    %837 = vmatprep.subr.mxu0 0.0
    %838 = vmatpush1.msra.mxu0 0.0
    %839 = vmatprep.subr.mxu0 0.0
    %840 = vmatpush1.msra.mxu0 0.0
    %841 = vmatprep.subr.mxu0 0.0
    %842 = vmatpush1.msra.mxu0 0.0
    %843 = vmatprep.subr.mxu0 0.0
    %844 = vmatpush1.msra.mxu0 0.0
    %845 = vmatprep.subr.mxu0 0.0
    %846 = vmatpush1.msra.mxu0 0.0
    %847 = vmatprep.subr.mxu0 0.0
    %848 = vmatpush1.msra.mxu0 0.0
    %849 = vmatprep.subr.mxu0 0.0
    %850 = vmatpush1.msra.mxu0 0.0
    %851 = vmatprep.subr.mxu0 0.0
    %852 = vmatpush1.msra.mxu0 0.0
    %853 = vmatprep.subr.mxu0 0.0
    %854 = vmatpush1.msra.mxu0 0.0
    %855 = vmatprep.subr.mxu0 0.0
    %856 = vmatpush1.msra.mxu0 0.0
    %857 = vmatprep.subr.mxu0 0.0
    %858 = vmatpush1.msra.mxu0 0.0
    %859 = vmatprep.subr.mxu0 0.0
    %860 = vmatpush1.msra.mxu0 0.0
    %861 = vmatprep.subr.mxu0 0.0
    %862 = vmatpush1.msra.mxu0 0.0
    %863 = vmatprep.subr.mxu0 0.0
    %864 = vmatpush1.msra.mxu0 0.0
    %865 = vmatprep.subr.mxu0 0.0
    %866 = vmatpush1.msra.mxu0 0.0
    %867 = vmatprep.subr.mxu0 0.0
    %868 = vmatpush1.msra.mxu0 0.0
    %869 = vmatprep.mubr.f32.mxu0 0.0
    %870 = vmatmul.mubr.f32.gmra.mrb[0].mxu0 %v108
    %v871 = vpop.f32.mrb[0].mxu0
    %v872 = vadd.f32 %v89, %v871
    %v873 = vpop.f32.mrb[0].mxu0
    %874 = vmatprep.mubr.f32.mxu0 0.0
    %875 = vmatmul.mubr.f32.gmra.mrb[0].mxu0 %v111
    %v876 = vpop.f32.mrb[0].mxu0
    %v877 = vadd.f32 %v94, %v876
    %v878 = vpop.f32.mrb[0].mxu0
    %879 = vmatprep.mubr.f32.mxu0 0.0
    %880 = vmatmul.mubr.f32.gmra.mrb[0].mxu0 %v114
    %v881 = vpop.f32.mrb[0].mxu0
    %v882 = vadd.f32 %v99, %v881
    %v883 = vpop.f32.mrb[0].mxu0
    %884 = vmatprep.mubr.f32.mxu0 0.0
    %885 = vmatmul.mubr.f32.gmra.mrb[0].mxu0 %v117
    %v886 = vpop.f32.mrb[0].mxu0
    %v887 = vadd.f32 %v104, %v886
    %v888 = vpop.f32.mrb[0].mxu0
    %889 = vdwg.mxu0
    %v890 = vmax.f32 %v872, 0.0
    %v891 = vmax.f32 %v877, 0.0
    %v892 = vmax.f32 %v882, 0.0
    %v893 = vmax.f32 %v887, 0.0
    %v894 = vmul.f32 %v211, %v890
    %v895 = vmul.f32 %v216, %v891
    %v896 = vmul.f32 %v221, %v892
    %v897 = vmul.f32 %v226, %v893
    %v898 = vadd.f32 %v894, %v895
    %v899 = vadd.f32 %v898, %v896
    %v900 = vadd.f32 %v899, %v897
    %v901 = vrot.slane %v900, 4
    %v902 = vadd.f32 %v900, %v901
    %v903 = vrot.slane %v902, 2
    %v904 = vadd.f32 %v902, %v903
    %v905 = vrot.slane %v904, 1
    %v906 = vadd.f32 %v904, %v905
    %s907 = scalar_lea.vmem %s1, 112
    %v908 = vld [vmem:[%s907] sm:$0xf]
    %v909 = vld [vmem:[%s907 + $0x4] sm:$0xf]
    %v910 = vld [vmem:[%s907 + $0x8] sm:$0xf]
    %v911 = vld [vmem:[%s907 + $0xc] sm:$0xf]
    %v912 = vunpack.c.l.bf16 %v908
    %v913 = vunpack.c.l.bf16 %v909
    %v914 = vunpack.c.l.bf16 %v910
    %v915 = vunpack.c.l.bf16 %v911
    %916 = vmatprep.subr.mxu0 0.0
    %917 = vmatpush1.msra.mxu0 %v912
    %918 = vmatprep.subr.mxu0 0.0
    %919 = vmatpush1.msra.mxu0 %v913
    %920 = vmatprep.subr.mxu0 0.0
    %921 = vmatpush1.msra.mxu0 %v914
    %922 = vmatprep.subr.mxu0 0.0
    %923 = vmatpush1.msra.mxu0 %v915
    %924 = vmatprep.subr.mxu0 0.0
    %925 = vmatpush1.msra.mxu0 0.0
    %926 = vmatprep.subr.mxu0 0.0
    %927 = vmatpush1.msra.mxu0 0.0
    %928 = vmatprep.subr.mxu0 0.0
    %929 = vmatpush1.msra.mxu0 0.0
    %930 = vmatprep.subr.mxu0 0.0
    %931 = vmatpush1.msra.mxu0 0.0
    %932 = vmatprep.subr.mxu0 0.0
    %933 = vmatpush1.msra.mxu0 0.0
    %934 = vmatprep.subr.mxu0 0.0
    %935 = vmatpush1.msra.mxu0 0.0
    %936 = vmatprep.subr.mxu0 0.0
    %937 = vmatpush1.msra.mxu0 0.0
    %938 = vmatprep.subr.mxu0 0.0
    %939 = vmatpush1.msra.mxu0 0.0
    %940 = vmatprep.subr.mxu0 0.0
    %941 = vmatpush1.msra.mxu0 0.0
    %942 = vmatprep.subr.mxu0 0.0
    %943 = vmatpush1.msra.mxu0 0.0
    %944 = vmatprep.subr.mxu0 0.0
    %945 = vmatpush1.msra.mxu0 0.0
    %946 = vmatprep.subr.mxu0 0.0
    %947 = vmatpush1.msra.mxu0 0.0
    %948 = vmatprep.subr.mxu0 0.0
    %949 = vmatpush1.msra.mxu0 0.0
    %950 = vmatprep.subr.mxu0 0.0
    %951 = vmatpush1.msra.mxu0 0.0
    %952 = vmatprep.subr.mxu0 0.0
    %953 = vmatpush1.msra.mxu0 0.0
    %954 = vmatprep.subr.mxu0 0.0
    %955 = vmatpush1.msra.mxu0 0.0
    %956 = vmatprep.subr.mxu0 0.0
    %957 = vmatpush1.msra.mxu0 0.0
    %958 = vmatprep.subr.mxu0 0.0
    %959 = vmatpush1.msra.mxu0 0.0
    %960 = vmatprep.subr.mxu0 0.0
    %961 = vmatpush1.msra.mxu0 0.0
    %962 = vmatprep.subr.mxu0 0.0
    %963 = vmatpush1.msra.mxu0 0.0
    %964 = vmatprep.subr.mxu0 0.0
    %965 = vmatpush1.msra.mxu0 0.0
    %966 = vmatprep.subr.mxu0 0.0
    %967 = vmatpush1.msra.mxu0 0.0
    %968 = vmatprep.subr.mxu0 0.0
    %969 = vmatpush1.msra.mxu0 0.0
    %970 = vmatprep.subr.mxu0 0.0
    %971 = vmatpush1.msra.mxu0 0.0
    %972 = vmatprep.subr.mxu0 0.0
    %973 = vmatpush1.msra.mxu0 0.0
    %974 = vmatprep.subr.mxu0 0.0
    %975 = vmatpush1.msra.mxu0 0.0
    %976 = vmatprep.subr.mxu0 0.0
    %977 = vmatpush1.msra.mxu0 0.0
    %978 = vmatprep.subr.mxu0 0.0
    %979 = vmatpush1.msra.mxu0 0.0
    %980 = vmatprep.mubr.f32.mxu0 0.0
    %981 = vmatmul.mubr.f32.gmra.mrb[0].mxu0 %v108
    %v982 = vpop.f32.mrb[0].mxu0
    %v983 = vadd.f32 %v89, %v982
    %v984 = vpop.f32.mrb[0].mxu0
    %985 = vmatprep.mubr.f32.mxu0 0.0
    %986 = vmatmul.mubr.f32.gmra.mrb[0].mxu0 %v111
    %v987 = vpop.f32.mrb[0].mxu0
    %v988 = vadd.f32 %v94, %v987
    %v989 = vpop.f32.mrb[0].mxu0
    %990 = vmatprep.mubr.f32.mxu0 0.0
    %991 = vmatmul.mubr.f32.gmra.mrb[0].mxu0 %v114
    %v992 = vpop.f32.mrb[0].mxu0
    %v993 = vadd.f32 %v99, %v992
    %v994 = vpop.f32.mrb[0].mxu0
    %995 = vmatprep.mubr.f32.mxu0 0.0
    %996 = vmatmul.mubr.f32.gmra.mrb[0].mxu0 %v117
    %v997 = vpop.f32.mrb[0].mxu0
    %v998 = vadd.f32 %v104, %v997
    %v999 = vpop.f32.mrb[0].mxu0
    %1000 = vdwg.mxu0
    %v1001 = vmax.f32 %v983, 0.0
    %v1002 = vmax.f32 %v988, 0.0
    %v1003 = vmax.f32 %v993, 0.0
    %v1004 = vmax.f32 %v998, 0.0
    %v1005 = vmul.f32 %v211, %v1001
    %v1006 = vmul.f32 %v216, %v1002
    %v1007 = vmul.f32 %v221, %v1003
    %v1008 = vmul.f32 %v226, %v1004
    %v1009 = vadd.f32 %v1005, %v1006
    %v1010 = vadd.f32 %v1009, %v1007
    %v1011 = vadd.f32 %v1010, %v1008
    %v1012 = vrot.slane %v1011, 4
    %v1013 = vadd.f32 %v1011, %v1012
    %v1014 = vrot.slane %v1013, 2
    %v1015 = vadd.f32 %v1013, %v1014
    %v1016 = vrot.slane %v1015, 1
    %v1017 = vadd.f32 %v1015, %v1016
    %vm1018 = vcmask 1040384
    %v1019 = vsel %vm1018, %v240, %v351
    %vm1020 = vcmask 1041408
    %v1021 = vsel %vm1020, %v1019, %v462
    %vm1022 = vcmask 1042432
    %v1023 = vsel %vm1022, %v1021, %v573
    %vm1024 = vcmask 1043456
    %v1025 = vsel %vm1024, %v1023, %v684
    %vm1026 = vcmask 1044480
    %v1027 = vsel %vm1026, %v1025, %v795
    %vm1028 = vcmask 1045504
    %v1029 = vsel %vm1028, %v1027, %v906
    %vm1030 = vcmask 1046528
    %v1031 = vsel %vm1030, %v1029, %v1017
    %v1032 = vlaneseq
    %v1033 = vshrl.u32 %v1032, 7
    %v1034 = vlaneseq
    %v1035 = vshrl.u32 %v1034, 7
    %v1036 = vsub.s32 0, %v1035
    %v1037 = vrot.slane %v48, %v1036
    %vm1038 = vcmp.lt.s32.totalorder %v1033, %v1037
    %v1039 = vsel %vm1038, %v1031, -1e+30
    %v1040 = vrot.slane %v1039, 4
    %v1041 = vmax.f32 %v1039, %v1040
    %v1042 = vrot.slane %v1041, 2
    %v1043 = vmax.f32 %v1041, %v1042
    %v1044 = vrot.slane %v1043, 1
    %v1045 = vmax.f32 %v1043, %v1044
    %v1046 = vsub.f32 %v1039, %v1045
    %v1047 = vmul.f32 %v1046, 1.442695
    %v1048 = vpow.pop %v1047
    %v1049 = vsel %vm1038, %v1048, 0.0
    %v1050 = vrot.slane %v1049, 4
    %v1051 = vadd.f32 %v1049, %v1050
    %v1052 = vrot.slane %v1051, 2
    %v1053 = vadd.f32 %v1051, %v1052
    %v1054 = vrot.slane %v1053, 1
    %v1055 = vadd.f32 %v1053, %v1054
    %vm1056 = vcmp.gt.f32.partialorder %v1055, 0.0
    %v1057 = vsel %vm1056, %v1055, 1.0
    %v1058 = vrcp.pop %v1057
    %v1059 = vlaneseq
    %v1060 = vshrl.u32 %v1059, 7
    %v1061 = vsub.s32 0, %v1060
    %v1062 = vrot.slane %v1049, %v1061
    %v1063 = vmul.f32 %v1062, %v82
    %v1064 = vmul.f32 %v1062, %v83
    %v1065 = vmul.f32 %v1062, %v84
    %v1066 = vmul.f32 %v1062, %v85
    %v1067 = vlaneseq
    %v1068 = vshrl.u32 %v1067, 7
    %v1069 = vsub.s32 1, %v1068
    %v1070 = vrot.slane %v1049, %v1069
    %v1071 = vmul.f32 %v1070, %v246
    %v1072 = vmul.f32 %v1070, %v247
    %v1073 = vmul.f32 %v1070, %v248
    %v1074 = vmul.f32 %v1070, %v249
    %v1075 = vadd.f32 %v1063, %v1071
    %v1076 = vadd.f32 %v1064, %v1072
    %v1077 = vadd.f32 %v1065, %v1073
    %v1078 = vadd.f32 %v1066, %v1074
    %v1079 = vlaneseq
    %v1080 = vshrl.u32 %v1079, 7
    %v1081 = vsub.s32 2, %v1080
    %v1082 = vrot.slane %v1049, %v1081
    %v1083 = vmul.f32 %v1082, %v357
    %v1084 = vmul.f32 %v1082, %v358
    %v1085 = vmul.f32 %v1082, %v359
    %v1086 = vmul.f32 %v1082, %v360
    %v1087 = vadd.f32 %v1075, %v1083
    %v1088 = vadd.f32 %v1076, %v1084
    %v1089 = vadd.f32 %v1077, %v1085
    %v1090 = vadd.f32 %v1078, %v1086
    %v1091 = vlaneseq
    %v1092 = vshrl.u32 %v1091, 7
    %v1093 = vsub.s32 3, %v1092
    %v1094 = vrot.slane %v1049, %v1093
    %v1095 = vmul.f32 %v1094, %v468
    %v1096 = vmul.f32 %v1094, %v469
    %v1097 = vmul.f32 %v1094, %v470
    %v1098 = vmul.f32 %v1094, %v471
    %v1099 = vadd.f32 %v1087, %v1095
    %v1100 = vadd.f32 %v1088, %v1096
    %v1101 = vadd.f32 %v1089, %v1097
    %v1102 = vadd.f32 %v1090, %v1098
    %v1103 = vlaneseq
    %v1104 = vshrl.u32 %v1103, 7
    %v1105 = vsub.s32 4, %v1104
    %v1106 = vrot.slane %v1049, %v1105
    %v1107 = vmul.f32 %v1106, %v579
    %v1108 = vmul.f32 %v1106, %v580
    %v1109 = vmul.f32 %v1106, %v581
    %v1110 = vmul.f32 %v1106, %v582
    %v1111 = vadd.f32 %v1099, %v1107
    %v1112 = vadd.f32 %v1100, %v1108
    %v1113 = vadd.f32 %v1101, %v1109
    %v1114 = vadd.f32 %v1102, %v1110
    %v1115 = vlaneseq
    %v1116 = vshrl.u32 %v1115, 7
    %v1117 = vsub.s32 5, %v1116
    %v1118 = vrot.slane %v1049, %v1117
    %v1119 = vmul.f32 %v1118, %v690
    %v1120 = vmul.f32 %v1118, %v691
    %v1121 = vmul.f32 %v1118, %v692
    %v1122 = vmul.f32 %v1118, %v693
    %v1123 = vadd.f32 %v1111, %v1119
    %v1124 = vadd.f32 %v1112, %v1120
    %v1125 = vadd.f32 %v1113, %v1121
    %v1126 = vadd.f32 %v1114, %v1122
    %v1127 = vlaneseq
    %v1128 = vshrl.u32 %v1127, 7
    %v1129 = vsub.s32 6, %v1128
    %v1130 = vrot.slane %v1049, %v1129
    %v1131 = vmul.f32 %v1130, %v801
    %v1132 = vmul.f32 %v1130, %v802
    %v1133 = vmul.f32 %v1130, %v803
    %v1134 = vmul.f32 %v1130, %v804
    %v1135 = vadd.f32 %v1123, %v1131
    %v1136 = vadd.f32 %v1124, %v1132
    %v1137 = vadd.f32 %v1125, %v1133
    %v1138 = vadd.f32 %v1126, %v1134
    %v1139 = vlaneseq
    %v1140 = vshrl.u32 %v1139, 7
    %v1141 = vsub.s32 7, %v1140
    %v1142 = vrot.slane %v1049, %v1141
    %v1143 = vmul.f32 %v1142, %v912
    %v1144 = vmul.f32 %v1142, %v913
    %v1145 = vmul.f32 %v1142, %v914
    %v1146 = vmul.f32 %v1142, %v915
    %v1147 = vadd.f32 %v1135, %v1143
    %v1148 = vadd.f32 %v1136, %v1144
    %v1149 = vadd.f32 %v1137, %v1145
    %v1150 = vadd.f32 %v1138, %v1146
    %v1151 = vmul.f32 %v1147, %v1058
    %v1152 = vmul.f32 %v1148, %v1058
    %v1153 = vmul.f32 %v1149, %v1058
    %v1154 = vmul.f32 %v1150, %v1058
    %1156 = vset.pattern.permute.xlu0 0
    %1157 = vperm.xlu0 %1156, %v68
    %v1158 = vpop.permute.xlu0 %1157
    %1161 = vset.pattern.permute.xlu0 0
    %1162 = vperm.xlu0 %1161, %v69
    %v1163 = vpop.permute.xlu0 %1162
    %1166 = vset.pattern.permute.xlu0 0
    %1167 = vperm.xlu0 %1166, %v70
    %v1168 = vpop.permute.xlu0 %1167
    %1171 = vset.pattern.permute.xlu0 0
    %1172 = vperm.xlu0 %1171, %v71
    %v1173 = vpop.permute.xlu0 %1172
    %v1176 = vsel %vm106, %v54, 0
    %v1179 = vsel %vm106, %v55, 0
    %v1182 = vsel %vm106, %v56, 0
    %v1185 = vsel %vm106, %v57, 0
    %1187 = vmatprep.subr.mxu0 0.0
    %1188 = vmatpush1.msra.mxu0 %v1151
    %1189 = vmatprep.subr.mxu0 0.0
    %1190 = vmatpush1.msra.mxu0 %v1152
    %1191 = vmatprep.subr.mxu0 0.0
    %1192 = vmatpush1.msra.mxu0 %v1153
    %1193 = vmatprep.subr.mxu0 0.0
    %1194 = vmatpush1.msra.mxu0 %v1154
    %1195 = vmatprep.subr.mxu0 0.0
    %1196 = vmatpush1.msra.mxu0 0.0
    %1197 = vmatprep.subr.mxu0 0.0
    %1198 = vmatpush1.msra.mxu0 0.0
    %1199 = vmatprep.subr.mxu0 0.0
    %1200 = vmatpush1.msra.mxu0 0.0
    %1201 = vmatprep.subr.mxu0 0.0
    %1202 = vmatpush1.msra.mxu0 0.0
    %1203 = vmatprep.subr.mxu0 0.0
    %1204 = vmatpush1.msra.mxu0 0.0
    %1205 = vmatprep.subr.mxu0 0.0
    %1206 = vmatpush1.msra.mxu0 0.0
    %1207 = vmatprep.subr.mxu0 0.0
    %1208 = vmatpush1.msra.mxu0 0.0
    %1209 = vmatprep.subr.mxu0 0.0
    %1210 = vmatpush1.msra.mxu0 0.0
    %1211 = vmatprep.subr.mxu0 0.0
    %1212 = vmatpush1.msra.mxu0 0.0
    %1213 = vmatprep.subr.mxu0 0.0
    %1214 = vmatpush1.msra.mxu0 0.0
    %1215 = vmatprep.subr.mxu0 0.0
    %1216 = vmatpush1.msra.mxu0 0.0
    %1217 = vmatprep.subr.mxu0 0.0
    %1218 = vmatpush1.msra.mxu0 0.0
    %1219 = vmatprep.subr.mxu0 0.0
    %1220 = vmatpush1.msra.mxu0 0.0
    %1221 = vmatprep.subr.mxu0 0.0
    %1222 = vmatpush1.msra.mxu0 0.0
    %1223 = vmatprep.subr.mxu0 0.0
    %1224 = vmatpush1.msra.mxu0 0.0
    %1225 = vmatprep.subr.mxu0 0.0
    %1226 = vmatpush1.msra.mxu0 0.0
    %1227 = vmatprep.subr.mxu0 0.0
    %1228 = vmatpush1.msra.mxu0 0.0
    %1229 = vmatprep.subr.mxu0 0.0
    %1230 = vmatpush1.msra.mxu0 0.0
    %1231 = vmatprep.subr.mxu0 0.0
    %1232 = vmatpush1.msra.mxu0 0.0
    %1233 = vmatprep.subr.mxu0 0.0
    %1234 = vmatpush1.msra.mxu0 0.0
    %1235 = vmatprep.subr.mxu0 0.0
    %1236 = vmatpush1.msra.mxu0 0.0
    %1237 = vmatprep.subr.mxu0 0.0
    %1238 = vmatpush1.msra.mxu0 0.0
    %1239 = vmatprep.subr.mxu0 0.0
    %1240 = vmatpush1.msra.mxu0 0.0
    %1241 = vmatprep.subr.mxu0 0.0
    %1242 = vmatpush1.msra.mxu0 0.0
    %1243 = vmatprep.subr.mxu0 0.0
    %1244 = vmatpush1.msra.mxu0 0.0
    %1245 = vmatprep.subr.mxu0 0.0
    %1246 = vmatpush1.msra.mxu0 0.0
    %1247 = vmatprep.subr.mxu0 0.0
    %1248 = vmatpush1.msra.mxu0 0.0
    %1249 = vmatprep.subr.mxu0 0.0
    %1250 = vmatpush1.msra.mxu0 0.0
    %1251 = vmatprep.mubr.f32.mxu0 0.0
    %1252 = vmatmul.mubr.f32.gmra.mrb[0].mxu0 %v1176
    %v1253 = vpop.f32.mrb[0].mxu0
    %v1254 = vadd.f32 %v1158, %v1253
    %v1255 = vpop.f32.mrb[0].mxu0
    %1256 = vmatprep.mubr.f32.mxu0 0.0
    %1257 = vmatmul.mubr.f32.gmra.mrb[0].mxu0 %v1179
    %v1258 = vpop.f32.mrb[0].mxu0
    %v1259 = vadd.f32 %v1163, %v1258
    %v1260 = vpop.f32.mrb[0].mxu0
    %1261 = vmatprep.mubr.f32.mxu0 0.0
    %1262 = vmatmul.mubr.f32.gmra.mrb[0].mxu0 %v1182
    %v1263 = vpop.f32.mrb[0].mxu0
    %v1264 = vadd.f32 %v1168, %v1263
    %v1265 = vpop.f32.mrb[0].mxu0
    %1266 = vmatprep.mubr.f32.mxu0 0.0
    %1267 = vmatmul.mubr.f32.gmra.mrb[0].mxu0 %v1185
    %v1268 = vpop.f32.mrb[0].mxu0
    %v1269 = vadd.f32 %v1173, %v1268
    %v1270 = vpop.f32.mrb[0].mxu0
    %1271 = vdwg.mxu0
    %v1272 = vmax.f32 %v1254, 0.0
    %v1273 = vmax.f32 %v1259, 0.0
    %v1274 = vmax.f32 %v1264, 0.0
    %v1275 = vmax.f32 %v1269, 0.0
    %1277 = vset.pattern.permute.xlu0 0
    %1278 = vperm.xlu0 %1277, %v73
    %v1279 = vpop.permute.xlu0 %1278
    %1282 = vset.pattern.permute.xlu0 0
    %1283 = vperm.xlu0 %1282, %v74
    %v1284 = vpop.permute.xlu0 %1283
    %1287 = vset.pattern.permute.xlu0 0
    %1288 = vperm.xlu0 %1287, %v75
    %v1289 = vpop.permute.xlu0 %1288
    %1292 = vset.pattern.permute.xlu0 0
    %1293 = vperm.xlu0 %1292, %v76
    %v1294 = vpop.permute.xlu0 %1293
    %v1296 = vmul.f32 %v1279, %v1272
    %v1297 = vmul.f32 %v1284, %v1273
    %v1298 = vmul.f32 %v1289, %v1274
    %v1299 = vmul.f32 %v1294, %v1275
    %v1300 = vadd.f32 %v1296, %v1297
    %v1301 = vadd.f32 %v1300, %v1298
    %v1302 = vadd.f32 %v1301, %v1299
    %v1303 = vrot.slane %v1302, 4
    %v1304 = vadd.f32 %v1302, %v1303
    %v1305 = vrot.slane %v1304, 2
    %v1306 = vadd.f32 %v1304, %v1305
    %v1307 = vrot.slane %v1306, 1
    %v1308 = vadd.f32 %v1306, %v1307
    %v1309 = vstv %s77
    %v1310 = vadd.f32 %v1308, %v1309
    %vm1311 = vcmp.gt.s32.totalorder %v48, 0
    %v1312 = vsel %vm1311, %v1310, 0.0
    %1313 = vst [vmem:[#allocation7] sm:$0x1] %v1312
    // Predicated region
    $region30: #{tpu_custom_call.1} parent=1 // pred_check
      _
    $region31: #{tpu_custom_call.1} parent=1 // pred_check_branch
      %1315 = sbr.rel (0) target = $region33
    $region32: #{tpu_custom_call.1} parent=1 // pred_region
      %s1317 = ssub.s32 16, 16
      %1318 = vsyncadd [#allocation4], %s1317
      %s1320 = sshll.u32 [#allocation7], 4
      %s1321 = int_to_ptr.vmem [resolvable:$true] %s1320
      %1323 = dma.vmem_to_hbm [thread:$0]  %s1321, 16, %s5, [#allocation4]
    $region33: #{tpu_custom_call.1} parent=1 // pred_fallthru
      _
    // Predicated region
    $region34: #{tpu_custom_call.1} parent=1 // pred_check
      _
    $region35: #{tpu_custom_call.1} parent=1 // pred_check_branch
      %1325 = sbr.rel (0) target = $region37
    $region36: #{tpu_custom_call.1} parent=1 // pred_region
      %1326 = dma.done [#allocation4], 16
    $region37: #{tpu_custom_call.1} parent=1 // pred_fallthru
      _
    %1327 = vsyncpa [#allocation3], 1
    %1328 = vsyncpa [#allocation4], 1
    %1329 = vsyncpa [#allocation5], 1

</llo_original>
